<compile_context>
chip_gen: v7x
topology: tpu7x:2x2x1
jax: 0.10.0
libtpu: 0.0.40
codegen_flags: <defaults>
</compile_context>

<pallas_src>
import functools

import jax
import jax.numpy as jnp
from jax.experimental import pallas as pl
from jax.experimental.pallas import tpu as pltpu


def _round_up(x, m):
    return (x + m - 1) // m * m


# -----------------------------------------------------------------------------
# Fused kernel: input projection (one big matmul into VMEM scratch) + sequential
# LSTM recurrence over time + final FC on h_T.  One grid step per batch tile.
# -----------------------------------------------------------------------------
def lstm_fused_kernel(x_ref, wih_ref, whh_ref, wfc_ref, b_ref, bfc_ref,
                      out_ref, gx_ref, *, seq_len, batch_tile, hidden_p,
                      unroll_threshold=64):
    Hp = hidden_p
    BB = batch_tile

    # ---- Hoisted, time-parallel input projection: (T*BB, I) x (I, 4Hp) on the MXU.
    # x tile rows are time-major (row t*BB + bb), so step t below reads a contiguous,
    # sublane-aligned (BB, 4Hp) slab of the scratch.  Accumulation/bias stays f32.
    gx_ref[...] = (
        jnp.dot(x_ref[...], wih_ref[...], preferred_element_type=jnp.float32)
        + b_ref[...]
    )

    def step(g_t, h, c):
        # gates = GX[t] + h_prev @ W_hh^T ; gate order (i, f, o, g), each gate slice
        # is a full 128-lane-aligned block (Hp is a multiple of 128).
        gates = g_t + jnp.dot(h.astype(whh_ref.dtype), whh_ref[...],
                              preferred_element_type=jnp.float32)
        sig = jax.nn.sigmoid(gates[:, :3 * Hp])     # one EUP pass over i|f|o slab
        i_g = sig[:, 0 * Hp:1 * Hp]
        f_g = sig[:, 1 * Hp:2 * Hp]
        o_g = sig[:, 2 * Hp:3 * Hp]
        g_g = jnp.tanh(gates[:, 3 * Hp:4 * Hp])
        c_new = f_g * c + i_g * g_g
        h_new = o_g * jnp.tanh(c_new)
        return h_new, c_new

    # h0 = c0 = zeros (matches torch.zeros(1, B, H) initial state); f32 elementwise state.
    h = jnp.zeros((BB, Hp), jnp.float32)
    c = jnp.zeros((BB, Hp), jnp.float32)

    if seq_len <= unroll_threshold:
        # Short clip: fully unrolled, static slices of the resident GX scratch.
        for t in range(seq_len):
            h, c = step(gx_ref[t * BB:(t + 1) * BB, :], h, c)
    else:
        # Long clip: partially unrolled rolled loop, aligned dynamic slices.
        def body(t, carry):
            h_, c_ = carry
            start = pl.multiple_of(t * BB, 8)
            return step(gx_ref[pl.ds(start, BB), :], h_, c_)
        h, c = jax.lax.fori_loop(0, seq_len, body, (h, c), unroll=2)

    # out = h_T @ W_fc^T + b_fc  (fc applied to out[:, -1, :]); lane-dense store (Cp % 128 == 0).
    out_ref[...] = (
        jnp.dot(h.astype(wfc_ref.dtype), wfc_ref[...],
                preferred_element_type=jnp.float32)
        + bfc_ref[...]
    ).astype(out_ref.dtype)


def _choose_batch_tile(batch, target):
    bp8 = _round_up(batch, 8)
    bb = min(_round_up(target, 8), bp8)
    # Keep at least two grid steps when the batch allows it (v7x: 2 TensorCores).
    if bp8 // bb < 2 and bp8 >= 16:
        bb = _round_up((bp8 + 1) // 2, 8)
    return bb


def video_lstm_forward(x, params, *, batch_tile=128, unroll_threshold=64):
    """x: (B, T, input_size) float32, batch_first. Returns (B, num_classes) float32.

    batch_tile: target rows per grid step (128 is a good default; 256 on v6e/v7x)."""
    B, T, I = x.shape
    Hp = params["hidden_p"]
    Cp = params["classes_p"]
    C = params["num_classes"]
    cdt = params["compute_dtype"]

    BB = _choose_batch_tile(B, batch_tile)
    Bp = _round_up(B, BB)
    nb = Bp // BB

    x = x.astype(cdt)
    if Bp != B:
        x = jnp.pad(x, ((0, Bp - B), (0, 0), (0, 0)))
    # Per batch tile, rows ordered time-major: row t*BB + bb holds x[b*BB + bb, t, :].
    # One-time relayout in the wrapper (small, off the kernel's serial critical path).
    x_tiles = (x.reshape(nb, BB, T, I)
                 .transpose(0, 2, 1, 3)
                 .reshape(nb, T * BB, I))

    kernel = functools.partial(lstm_fused_kernel, seq_len=T, batch_tile=BB,
                               hidden_p=Hp, unroll_threshold=unroll_threshold)

    # VMEM budget: double-buffered inputs/outputs + f32 GX scratch; raise the scoped
    # limit only when the conservative default (16 MiB on v5e) would be too small.
    wb = jnp.dtype(cdt).itemsize
    vmem_est = (2 * T * BB * I * wb
                + 2 * (I * 4 * Hp + Hp * 4 * Hp + Hp * Cp) * wb
                + 2 * (4 * Hp + Cp) * 4
                + 2 * BB * Cp * 4
                + T * BB * 4 * Hp * 4)
    cp_kwargs = dict(dimension_semantics=("parallel",))
    if vmem_est > 12 * 1024 * 1024:
        cp_kwargs["vmem_limit_bytes"] = min(int(vmem_est * 1.3) + (1 << 20),
                                            64 * 1024 * 1024)

    out_p = pl.pallas_call(
        kernel,
        out_shape=jax.ShapeDtypeStruct((Bp, Cp), jnp.float32),
        grid_spec=pltpu.PrefetchScalarGridSpec(
            num_scalar_prefetch=0,
            grid=(nb,),
            in_specs=[
                pl.BlockSpec((None, T * BB, I), lambda b: (b, 0, 0)),  # x tile, time-major
                pl.BlockSpec((I, 4 * Hp), lambda b: (0, 0)),           # W_ih^T (grid-invariant)
                pl.BlockSpec((Hp, 4 * Hp), lambda b: (0, 0)),          # W_hh^T
                pl.BlockSpec((Hp, Cp), lambda b: (0, 0)),              # W_fc^T
                pl.BlockSpec((1, 4 * Hp), lambda b: (0, 0)),           # fused LSTM bias (f32)
                pl.BlockSpec((1, Cp), lambda b: (0, 0)),               # fc bias (f32)
            ],
            out_specs=pl.BlockSpec((BB, Cp), lambda b: (b, 0)),
            scratch_shapes=[pltpu.VMEM((T * BB, 4 * Hp), jnp.float32)],  # GX never hits HBM
        ),
        compiler_params=pltpu.CompilerParams(**cp_kwargs),
    )(x_tiles, params["w_ih_t"], params["w_hh_t"], params["w_fc_t"],
      params["b"], params["b_fc"])

    return out_p[:B, :C]


# -----------------------------------------------------------------------------
# Parameter init (PyTorch layout) + one-time packing into padded kernel layout.
# -----------------------------------------------------------------------------
def init_raw_params(key, input_size, hidden_size, num_classes):
    """PyTorch-shaped params with the default U(-1/sqrt(H), 1/sqrt(H)) init."""
    k = 1.0 / jnp.sqrt(jnp.float32(hidden_size))
    keys = jax.random.split(key, 6)
    u = lambda kk, shape: jax.random.uniform(kk, shape, jnp.float32, -k, k)
    return {
        "w_ih": u(keys[0], (4 * hidden_size, input_size)),   # weight_ih_l0
        "w_hh": u(keys[1], (4 * hidden_size, hidden_size)),  # weight_hh_l0
        "b_ih": u(keys[2], (4 * hidden_size,)),
        "b_hh": u(keys[3], (4 * hidden_size,)),
        "w_fc": u(keys[4], (num_classes, hidden_size)),      # fc.weight
        "b_fc": u(keys[5], (num_classes,)),
    }


def pack_params(raw, compute_dtype=jnp.float32):
    """Pad H and C to multiples of 128; transpose for row-major x @ W; repack the gate
    order from PyTorch (i, f, g, o) to (i, f, o, g) so the kernel applies one sigmoid to
    a contiguous 3*Hp slab. Weights stored in `compute_dtype` (bf16 recommended on
    v6e/v7x MXU); biases stay f32 (added after the f32-accumulated matmul)."""
    H = raw["w_hh"].shape[1]
    I = raw["w_ih"].shape[1]
    C = raw["w_fc"].shape[0]
    Hp = _round_up(H, 128)
    Cp = _round_up(C, 128)

    w_ih_t = jnp.zeros((I, 4 * Hp), jnp.float32)
    w_hh_t = jnp.zeros((Hp, 4 * Hp), jnp.float32)
    b = jnp.zeros((1, 4 * Hp), jnp.float32)
    gate_src = (0, 1, 3, 2)   # dest blocks (i, f, o, g) <- PyTorch row-blocks (i, f, g, o)
    for dst, src in enumerate(gate_src):
        w_ih_t = w_ih_t.at[:, dst * Hp:dst * Hp + H].set(
            raw["w_ih"][src * H:(src + 1) * H, :].T)
        w_hh_t = w_hh_t.at[:H, dst * Hp:dst * Hp + H].set(
            raw["w_hh"][src * H:(src + 1) * H, :].T)
        b = b.at[0, dst * Hp:dst * Hp + H].set(
            raw["b_ih"][src * H:(src + 1) * H] + raw["b_hh"][src * H:(src + 1) * H])

    w_fc_t = jnp.zeros((Hp, Cp), jnp.float32).at[:H, :C].set(raw["w_fc"].T)
    b_fc = jnp.zeros((1, Cp), jnp.float32).at[0, :C].set(raw["b_fc"])

    return {
        "w_ih_t": w_ih_t.astype(compute_dtype),
        "w_hh_t": w_hh_t.astype(compute_dtype),
        "w_fc_t": w_fc_t.astype(compute_dtype),
        "b": b, "b_fc": b_fc,
        "hidden_p": Hp, "classes_p": Cp, "num_classes": C,
        "compute_dtype": compute_dtype,
    }


def reference_forward(x, raw):
    """Pure-JAX lax.scan reference mirroring PyTorch nn.LSTM(batch_first) + Linear."""
    B, T, I = x.shape
    H = raw["w_hh"].shape[1]
    bias = raw["b_ih"] + raw["b_hh"]

    def step(carry, x_t):
        h, c = carry
        gates = x_t @ raw["w_ih"].T + h @ raw["w_hh"].T + bias
        i = jax.nn.sigmoid(gates[:, 0 * H:1 * H])
        f = jax.nn.sigmoid(gates[:, 1 * H:2 * H])
        g = jnp.tanh(gates[:, 2 * H:3 * H])
        o = jax.nn.sigmoid(gates[:, 3 * H:4 * H])
        c = f * c + i * g
        h = o * jnp.tanh(c)
        return (h, c), None

    h0 = jnp.zeros((B, H), jnp.float32)
    c0 = jnp.zeros((B, H), jnp.float32)
    (h_last, _), _ = jax.lax.scan(step, (h0, c0), jnp.transpose(x, (1, 0, 2)))
    return h_last @ raw["w_fc"].T + raw["b_fc"]


if __name__ == "__main__":
    B, T, INPUT_SIZE, HIDDEN_SIZE, NUM_CLASSES = 2, 8, 16, 32, 4

    key = jax.random.PRNGKey(0)
    kx, kp = jax.random.split(key)
    x = jax.random.normal(kx, (B, T, INPUT_SIZE), jnp.float32)

    raw = init_raw_params(kp, INPUT_SIZE, HIDDEN_SIZE, NUM_CLASSES)
    ref = jax.block_until_ready(reference_forward(x, raw))

    # f32 MXU operands: bit-tight vs the f32 reference.
    params_f32 = pack_params(raw, compute_dtype=jnp.float32)
    out_f32 = jax.block_until_ready(video_lstm_forward(x, params_f32))
    assert out_f32.shape == (B, NUM_CLASSES)
    assert jnp.allclose(out_f32, ref, atol=1e-4, rtol=1e-4), "f32 Pallas LSTM mismatch"

    # bf16 MXU operands (v6e/v7x fast path); elementwise math stays f32 -> looser tol.
    params_bf16 = pack_params(raw, compute_dtype=jnp.bfloat16)
    out_bf16 = jax.block_until_ready(video_lstm_forward(x, params_bf16))
    assert out_bf16.shape == (B, NUM_CLASSES)
    assert jnp.allclose(out_bf16, ref, atol=5e-2, rtol=5e-2), "bf16 Pallas LSTM mismatch"

    print("KERNEL_OK")
</pallas_src>

<mosaic_0001>
module attributes {stable_mosaic.version = 11 : i64} {
  func.func @lstm_fused_kernel(%arg0: i32, %arg1: memref<1x64x16xf32, #tpu.memory_space<vmem>>, %arg2: memref<16x512xf32, #tpu.memory_space<vmem>>, %arg3: memref<128x512xf32, #tpu.memory_space<vmem>>, %arg4: memref<128x128xf32, #tpu.memory_space<vmem>>, %arg5: memref<1x512xf32, #tpu.memory_space<vmem>>, %arg6: memref<1x128xf32, #tpu.memory_space<vmem>>, %arg7: memref<8x128xf32, #tpu.memory_space<vmem>>, %arg8: memref<64x512xf32, #tpu.memory_space<vmem>>) attributes {dimension_semantics = [#tpu.dimension_semantics<parallel>], iteration_bounds = array<i64: 1>, scalar_prefetch = 0 : i64, scratch_operands = 1 : i64, tpu.core_type = #tpu.core_type<tc>, window_params = [{transform_indices = @transform_0, window_bounds = array<i64: 1, 64, 16>}, {pipeline_mode = #tpu.pipeline_mode<synchronous>, transform_indices = @transform_1, window_bounds = array<i64: 16, 512>}, {pipeline_mode = #tpu.pipeline_mode<synchronous>, transform_indices = @transform_2, window_bounds = array<i64: 128, 512>}, {pipeline_mode = #tpu.pipeline_mode<synchronous>, transform_indices = @transform_3, window_bounds = array<i64: 128, 128>}, {pipeline_mode = #tpu.pipeline_mode<synchronous>, transform_indices = @transform_4, window_bounds = array<i64: 1, 512>}, {pipeline_mode = #tpu.pipeline_mode<synchronous>, transform_indices = @transform_5, window_bounds = array<i64: 1, 128>}, {transform_indices = @transform_6, window_bounds = array<i64: 8, 128>}]} {
    %c0 = arith.constant 0 : index
    %c0_0 = arith.constant 0 : index
    %c0_1 = arith.constant 0 : index
    %0 = vector.load %arg1[%c0, %c0_0, %c0_1] : memref<1x64x16xf32, #tpu.memory_space<vmem>>, vector<1x64x16xf32>
    %1 = vector.shape_cast %0 : vector<1x64x16xf32> to vector<64x16xf32>
    %c0_2 = arith.constant 0 : index
    %c0_3 = arith.constant 0 : index
    %2 = vector.load %arg2[%c0_2, %c0_3] : memref<16x512xf32, #tpu.memory_space<vmem>>, vector<16x512xf32>
    %cst = arith.constant dense<0.000000e+00> : vector<64x512xf32>
    %3 = tpu.matmul %1, %2, %cst {dimension_numbers = #tpu.dot_dimension_numbers<[1], [0], [0], [1], [0, 0, 1, 1], [], []>} : vector<64x16xf32>, vector<16x512xf32>, vector<64x512xf32> -> vector<64x512xf32>
    %c0_4 = arith.constant 0 : index
    %c0_5 = arith.constant 0 : index
    %4 = vector.load %arg5[%c0_4, %c0_5] : memref<1x512xf32, #tpu.memory_space<vmem>>, vector<1x512xf32>
    %5 = vector.broadcast %4 : vector<1x512xf32> to vector<64x512xf32>
    %6 = arith.addf %3, %5 : vector<64x512xf32>
    %c0_6 = arith.constant 0 : index
    %c0_7 = arith.constant 0 : index
    %7 = vector.load %arg8[%c0_6, %c0_7] : memref<64x512xf32, #tpu.memory_space<vmem>>, vector<64x512xf32>
    tpu.vector_store %arg8[%c0_6, %c0_7], %6 {strides = array<i32>} : memref<64x512xf32, #tpu.memory_space<vmem>>, vector<64x512xf32>,
    %cst_8 = arith.constant 0.000000e+00 : f32
    %8 = vector.broadcast %cst_8 : f32 to vector<8x128xf32>
    %cst_9 = arith.constant 0.000000e+00 : f32
    %9 = vector.broadcast %cst_9 : f32 to vector<8x128xf32>
    %c0_10 = arith.constant 0 : index
    %c0_11 = arith.constant 0 : index
    %10 = vector.load %arg8[%c0_10, %c0_11] : memref<64x512xf32, #tpu.memory_space<vmem>>, vector<8x512xf32>
    %c0_12 = arith.constant 0 : index
    %c0_13 = arith.constant 0 : index
    %11 = vector.load %arg3[%c0_12, %c0_13] : memref<128x512xf32, #tpu.memory_space<vmem>>, vector<128x512xf32>
    %cst_14 = arith.constant dense<0.000000e+00> : vector<8x512xf32>
    %12 = tpu.matmul %8, %11, %cst_14 {dimension_numbers = #tpu.dot_dimension_numbers<[1], [0], [0], [1], [0, 0, 1, 1], [], []>} : vector<8x128xf32>, vector<128x512xf32>, vector<8x512xf32> -> vector<8x512xf32>
    %13 = arith.addf %10, %12 : vector<8x512xf32>
    %14 = vector.extract_strided_slice %13 {offsets = [0, 0], sizes = [8, 384], strides = [1, 1]} : vector<8x512xf32> to vector<8x384xf32>
    %15 = arith.negf %14 : vector<8x384xf32>
    %16 = math.exp %15 : vector<8x384xf32>
    %cst_15 = arith.constant 1.000000e+00 : f32
    %17 = vector.broadcast %cst_15 : f32 to vector<8x384xf32>
    %18 = arith.addf %17, %16 : vector<8x384xf32>
    %19 = arith.divf %17, %18 : vector<8x384xf32>
    %20 = vector.extract_strided_slice %19 {offsets = [0, 0], sizes = [8, 128], strides = [1, 1]} : vector<8x384xf32> to vector<8x128xf32>
    %21 = vector.extract_strided_slice %19 {offsets = [0, 128], sizes = [8, 128], strides = [1, 1]} : vector<8x384xf32> to vector<8x128xf32>
    %22 = vector.extract_strided_slice %19 {offsets = [0, 256], sizes = [8, 128], strides = [1, 1]} : vector<8x384xf32> to vector<8x128xf32>
    %23 = vector.extract_strided_slice %13 {offsets = [0, 384], sizes = [8, 128], strides = [1, 1]} : vector<8x512xf32> to vector<8x128xf32>
    %24 = math.tanh %23 : vector<8x128xf32>
    %25 = arith.mulf %21, %9 : vector<8x128xf32>
    %26 = arith.mulf %20, %24 : vector<8x128xf32>
    %27 = arith.addf %25, %26 : vector<8x128xf32>
    %28 = math.tanh %27 : vector<8x128xf32>
    %29 = arith.mulf %22, %28 : vector<8x128xf32>
    %c8 = arith.constant 8 : index
    %c0_16 = arith.constant 0 : index
    %30 = vector.load %arg8[%c8, %c0_16] : memref<64x512xf32, #tpu.memory_space<vmem>>, vector<8x512xf32>
    %c0_17 = arith.constant 0 : index
    %c0_18 = arith.constant 0 : index
    %31 = vector.load %arg3[%c0_17, %c0_18] : memref<128x512xf32, #tpu.memory_space<vmem>>, vector<128x512xf32>
    %cst_19 = arith.constant dense<0.000000e+00> : vector<8x512xf32>
    %32 = tpu.matmul %29, %31, %cst_19 {dimension_numbers = #tpu.dot_dimension_numbers<[1], [0], [0], [1], [0, 0, 1, 1], [], []>} : vector<8x128xf32>, vector<128x512xf32>, vector<8x512xf32> -> vector<8x512xf32>
    %33 = arith.addf %30, %32 : vector<8x512xf32>
    %34 = vector.extract_strided_slice %33 {offsets = [0, 0], sizes = [8, 384], strides = [1, 1]} : vector<8x512xf32> to vector<8x384xf32>
    %35 = arith.negf %34 : vector<8x384xf32>
    %36 = math.exp %35 : vector<8x384xf32>
    %cst_20 = arith.constant 1.000000e+00 : f32
    %37 = vector.broadcast %cst_20 : f32 to vector<8x384xf32>
    %38 = arith.addf %37, %36 : vector<8x384xf32>
    %39 = arith.divf %37, %38 : vector<8x384xf32>
    %40 = vector.extract_strided_slice %39 {offsets = [0, 0], sizes = [8, 128], strides = [1, 1]} : vector<8x384xf32> to vector<8x128xf32>
    %41 = vector.extract_strided_slice %39 {offsets = [0, 128], sizes = [8, 128], strides = [1, 1]} : vector<8x384xf32> to vector<8x128xf32>
    %42 = vector.extract_strided_slice %39 {offsets = [0, 256], sizes = [8, 128], strides = [1, 1]} : vector<8x384xf32> to vector<8x128xf32>
    %43 = vector.extract_strided_slice %33 {offsets = [0, 384], sizes = [8, 128], strides = [1, 1]} : vector<8x512xf32> to vector<8x128xf32>
    %44 = math.tanh %43 : vector<8x128xf32>
    %45 = arith.mulf %41, %27 : vector<8x128xf32>
    %46 = arith.mulf %40, %44 : vector<8x128xf32>
    %47 = arith.addf %45, %46 : vector<8x128xf32>
    %48 = math.tanh %47 : vector<8x128xf32>
    %49 = arith.mulf %42, %48 : vector<8x128xf32>
    %c16 = arith.constant 16 : index
    %c0_21 = arith.constant 0 : index
    %50 = vector.load %arg8[%c16, %c0_21] : memref<64x512xf32, #tpu.memory_space<vmem>>, vector<8x512xf32>
    %c0_22 = arith.constant 0 : index
    %c0_23 = arith.constant 0 : index
    %51 = vector.load %arg3[%c0_22, %c0_23] : memref<128x512xf32, #tpu.memory_space<vmem>>, vector<128x512xf32>
    %cst_24 = arith.constant dense<0.000000e+00> : vector<8x512xf32>
    %52 = tpu.matmul %49, %51, %cst_24 {dimension_numbers = #tpu.dot_dimension_numbers<[1], [0], [0], [1], [0, 0, 1, 1], [], []>} : vector<8x128xf32>, vector<128x512xf32>, vector<8x512xf32> -> vector<8x512xf32>
    %53 = arith.addf %50, %52 : vector<8x512xf32>
    %54 = vector.extract_strided_slice %53 {offsets = [0, 0], sizes = [8, 384], strides = [1, 1]} : vector<8x512xf32> to vector<8x384xf32>
    %55 = arith.negf %54 : vector<8x384xf32>
    %56 = math.exp %55 : vector<8x384xf32>
    %cst_25 = arith.constant 1.000000e+00 : f32
    %57 = vector.broadcast %cst_25 : f32 to vector<8x384xf32>
    %58 = arith.addf %57, %56 : vector<8x384xf32>
    %59 = arith.divf %57, %58 : vector<8x384xf32>
    %60 = vector.extract_strided_slice %59 {offsets = [0, 0], sizes = [8, 128], strides = [1, 1]} : vector<8x384xf32> to vector<8x128xf32>
    %61 = vector.extract_strided_slice %59 {offsets = [0, 128], sizes = [8, 128], strides = [1, 1]} : vector<8x384xf32> to vector<8x128xf32>
    %62 = vector.extract_strided_slice %59 {offsets = [0, 256], sizes = [8, 128], strides = [1, 1]} : vector<8x384xf32> to vector<8x128xf32>
    %63 = vector.extract_strided_slice %53 {offsets = [0, 384], sizes = [8, 128], strides = [1, 1]} : vector<8x512xf32> to vector<8x128xf32>
    %64 = math.tanh %63 : vector<8x128xf32>
    %65 = arith.mulf %61, %47 : vector<8x128xf32>
    %66 = arith.mulf %60, %64 : vector<8x128xf32>
    %67 = arith.addf %65, %66 : vector<8x128xf32>
    %68 = math.tanh %67 : vector<8x128xf32>
    %69 = arith.mulf %62, %68 : vector<8x128xf32>
    %c24 = arith.constant 24 : index
    %c0_26 = arith.constant 0 : index
    %70 = vector.load %arg8[%c24, %c0_26] : memref<64x512xf32, #tpu.memory_space<vmem>>, vector<8x512xf32>
    %c0_27 = arith.constant 0 : index
    %c0_28 = arith.constant 0 : index
    %71 = vector.load %arg3[%c0_27, %c0_28] : memref<128x512xf32, #tpu.memory_space<vmem>>, vector<128x512xf32>
    %cst_29 = arith.constant dense<0.000000e+00> : vector<8x512xf32>
    %72 = tpu.matmul %69, %71, %cst_29 {dimension_numbers = #tpu.dot_dimension_numbers<[1], [0], [0], [1], [0, 0, 1, 1], [], []>} : vector<8x128xf32>, vector<128x512xf32>, vector<8x512xf32> -> vector<8x512xf32>
    %73 = arith.addf %70, %72 : vector<8x512xf32>
    %74 = vector.extract_strided_slice %73 {offsets = [0, 0], sizes = [8, 384], strides = [1, 1]} : vector<8x512xf32> to vector<8x384xf32>
    %75 = arith.negf %74 : vector<8x384xf32>
    %76 = math.exp %75 : vector<8x384xf32>
    %cst_30 = arith.constant 1.000000e+00 : f32
    %77 = vector.broadcast %cst_30 : f32 to vector<8x384xf32>
    %78 = arith.addf %77, %76 : vector<8x384xf32>
    %79 = arith.divf %77, %78 : vector<8x384xf32>
    %80 = vector.extract_strided_slice %79 {offsets = [0, 0], sizes = [8, 128], strides = [1, 1]} : vector<8x384xf32> to vector<8x128xf32>
    %81 = vector.extract_strided_slice %79 {offsets = [0, 128], sizes = [8, 128], strides = [1, 1]} : vector<8x384xf32> to vector<8x128xf32>
    %82 = vector.extract_strided_slice %79 {offsets = [0, 256], sizes = [8, 128], strides = [1, 1]} : vector<8x384xf32> to vector<8x128xf32>
    %83 = vector.extract_strided_slice %73 {offsets = [0, 384], sizes = [8, 128], strides = [1, 1]} : vector<8x512xf32> to vector<8x128xf32>
    %84 = math.tanh %83 : vector<8x128xf32>
    %85 = arith.mulf %81, %67 : vector<8x128xf32>
    %86 = arith.mulf %80, %84 : vector<8x128xf32>
    %87 = arith.addf %85, %86 : vector<8x128xf32>
    %88 = math.tanh %87 : vector<8x128xf32>
    %89 = arith.mulf %82, %88 : vector<8x128xf32>
    %c32 = arith.constant 32 : index
    %c0_31 = arith.constant 0 : index
    %90 = vector.load %arg8[%c32, %c0_31] : memref<64x512xf32, #tpu.memory_space<vmem>>, vector<8x512xf32>
    %c0_32 = arith.constant 0 : index
    %c0_33 = arith.constant 0 : index
    %91 = vector.load %arg3[%c0_32, %c0_33] : memref<128x512xf32, #tpu.memory_space<vmem>>, vector<128x512xf32>
    %cst_34 = arith.constant dense<0.000000e+00> : vector<8x512xf32>
    %92 = tpu.matmul %89, %91, %cst_34 {dimension_numbers = #tpu.dot_dimension_numbers<[1], [0], [0], [1], [0, 0, 1, 1], [], []>} : vector<8x128xf32>, vector<128x512xf32>, vector<8x512xf32> -> vector<8x512xf32>
    %93 = arith.addf %90, %92 : vector<8x512xf32>
    %94 = vector.extract_strided_slice %93 {offsets = [0, 0], sizes = [8, 384], strides = [1, 1]} : vector<8x512xf32> to vector<8x384xf32>
    %95 = arith.negf %94 : vector<8x384xf32>
    %96 = math.exp %95 : vector<8x384xf32>
    %cst_35 = arith.constant 1.000000e+00 : f32
    %97 = vector.broadcast %cst_35 : f32 to vector<8x384xf32>
    %98 = arith.addf %97, %96 : vector<8x384xf32>
    %99 = arith.divf %97, %98 : vector<8x384xf32>
    %100 = vector.extract_strided_slice %99 {offsets = [0, 0], sizes = [8, 128], strides = [1, 1]} : vector<8x384xf32> to vector<8x128xf32>
    %101 = vector.extract_strided_slice %99 {offsets = [0, 128], sizes = [8, 128], strides = [1, 1]} : vector<8x384xf32> to vector<8x128xf32>
    %102 = vector.extract_strided_slice %99 {offsets = [0, 256], sizes = [8, 128], strides = [1, 1]} : vector<8x384xf32> to vector<8x128xf32>
    %103 = vector.extract_strided_slice %93 {offsets = [0, 384], sizes = [8, 128], strides = [1, 1]} : vector<8x512xf32> to vector<8x128xf32>
    %104 = math.tanh %103 : vector<8x128xf32>
    %105 = arith.mulf %101, %87 : vector<8x128xf32>
    %106 = arith.mulf %100, %104 : vector<8x128xf32>
    %107 = arith.addf %105, %106 : vector<8x128xf32>
    %108 = math.tanh %107 : vector<8x128xf32>
    %109 = arith.mulf %102, %108 : vector<8x128xf32>
    %c40 = arith.constant 40 : index
    %c0_36 = arith.constant 0 : index
    %110 = vector.load %arg8[%c40, %c0_36] : memref<64x512xf32, #tpu.memory_space<vmem>>, vector<8x512xf32>
    %c0_37 = arith.constant 0 : index
    %c0_38 = arith.constant 0 : index
    %111 = vector.load %arg3[%c0_37, %c0_38] : memref<128x512xf32, #tpu.memory_space<vmem>>, vector<128x512xf32>
    %cst_39 = arith.constant dense<0.000000e+00> : vector<8x512xf32>
    %112 = tpu.matmul %109, %111, %cst_39 {dimension_numbers = #tpu.dot_dimension_numbers<[1], [0], [0], [1], [0, 0, 1, 1], [], []>} : vector<8x128xf32>, vector<128x512xf32>, vector<8x512xf32> -> vector<8x512xf32>
    %113 = arith.addf %110, %112 : vector<8x512xf32>
    %114 = vector.extract_strided_slice %113 {offsets = [0, 0], sizes = [8, 384], strides = [1, 1]} : vector<8x512xf32> to vector<8x384xf32>
    %115 = arith.negf %114 : vector<8x384xf32>
    %116 = math.exp %115 : vector<8x384xf32>
    %cst_40 = arith.constant 1.000000e+00 : f32
    %117 = vector.broadcast %cst_40 : f32 to vector<8x384xf32>
    %118 = arith.addf %117, %116 : vector<8x384xf32>
    %119 = arith.divf %117, %118 : vector<8x384xf32>
    %120 = vector.extract_strided_slice %119 {offsets = [0, 0], sizes = [8, 128], strides = [1, 1]} : vector<8x384xf32> to vector<8x128xf32>
    %121 = vector.extract_strided_slice %119 {offsets = [0, 128], sizes = [8, 128], strides = [1, 1]} : vector<8x384xf32> to vector<8x128xf32>
    %122 = vector.extract_strided_slice %119 {offsets = [0, 256], sizes = [8, 128], strides = [1, 1]} : vector<8x384xf32> to vector<8x128xf32>
    %123 = vector.extract_strided_slice %113 {offsets = [0, 384], sizes = [8, 128], strides = [1, 1]} : vector<8x512xf32> to vector<8x128xf32>
    %124 = math.tanh %123 : vector<8x128xf32>
    %125 = arith.mulf %121, %107 : vector<8x128xf32>
    %126 = arith.mulf %120, %124 : vector<8x128xf32>
    %127 = arith.addf %125, %126 : vector<8x128xf32>
    %128 = math.tanh %127 : vector<8x128xf32>
    %129 = arith.mulf %122, %128 : vector<8x128xf32>
    %c48 = arith.constant 48 : index
    %c0_41 = arith.constant 0 : index
    %130 = vector.load %arg8[%c48, %c0_41] : memref<64x512xf32, #tpu.memory_space<vmem>>, vector<8x512xf32>
    %c0_42 = arith.constant 0 : index
    %c0_43 = arith.constant 0 : index
    %131 = vector.load %arg3[%c0_42, %c0_43] : memref<128x512xf32, #tpu.memory_space<vmem>>, vector<128x512xf32>
    %cst_44 = arith.constant dense<0.000000e+00> : vector<8x512xf32>
    %132 = tpu.matmul %129, %131, %cst_44 {dimension_numbers = #tpu.dot_dimension_numbers<[1], [0], [0], [1], [0, 0, 1, 1], [], []>} : vector<8x128xf32>, vector<128x512xf32>, vector<8x512xf32> -> vector<8x512xf32>
    %133 = arith.addf %130, %132 : vector<8x512xf32>
    %134 = vector.extract_strided_slice %133 {offsets = [0, 0], sizes = [8, 384], strides = [1, 1]} : vector<8x512xf32> to vector<8x384xf32>
    %135 = arith.negf %134 : vector<8x384xf32>
    %136 = math.exp %135 : vector<8x384xf32>
    %cst_45 = arith.constant 1.000000e+00 : f32
    %137 = vector.broadcast %cst_45 : f32 to vector<8x384xf32>
    %138 = arith.addf %137, %136 : vector<8x384xf32>
    %139 = arith.divf %137, %138 : vector<8x384xf32>
    %140 = vector.extract_strided_slice %139 {offsets = [0, 0], sizes = [8, 128], strides = [1, 1]} : vector<8x384xf32> to vector<8x128xf32>
    %141 = vector.extract_strided_slice %139 {offsets = [0, 128], sizes = [8, 128], strides = [1, 1]} : vector<8x384xf32> to vector<8x128xf32>
    %142 = vector.extract_strided_slice %139 {offsets = [0, 256], sizes = [8, 128], strides = [1, 1]} : vector<8x384xf32> to vector<8x128xf32>
    %143 = vector.extract_strided_slice %133 {offsets = [0, 384], sizes = [8, 128], strides = [1, 1]} : vector<8x512xf32> to vector<8x128xf32>
    %144 = math.tanh %143 : vector<8x128xf32>
    %145 = arith.mulf %141, %127 : vector<8x128xf32>
    %146 = arith.mulf %140, %144 : vector<8x128xf32>
    %147 = arith.addf %145, %146 : vector<8x128xf32>
    %148 = math.tanh %147 : vector<8x128xf32>
    %149 = arith.mulf %142, %148 : vector<8x128xf32>
    %c56 = arith.constant 56 : index
    %c0_46 = arith.constant 0 : index
    %150 = vector.load %arg8[%c56, %c0_46] : memref<64x512xf32, #tpu.memory_space<vmem>>, vector<8x512xf32>
    %c0_47 = arith.constant 0 : index
    %c0_48 = arith.constant 0 : index
    %151 = vector.load %arg3[%c0_47, %c0_48] : memref<128x512xf32, #tpu.memory_space<vmem>>, vector<128x512xf32>
    %cst_49 = arith.constant dense<0.000000e+00> : vector<8x512xf32>
    %152 = tpu.matmul %149, %151, %cst_49 {dimension_numbers = #tpu.dot_dimension_numbers<[1], [0], [0], [1], [0, 0, 1, 1], [], []>} : vector<8x128xf32>, vector<128x512xf32>, vector<8x512xf32> -> vector<8x512xf32>
    %153 = arith.addf %150, %152 : vector<8x512xf32>
    %154 = vector.extract_strided_slice %153 {offsets = [0, 0], sizes = [8, 384], strides = [1, 1]} : vector<8x512xf32> to vector<8x384xf32>
    %155 = arith.negf %154 : vector<8x384xf32>
    %156 = math.exp %155 : vector<8x384xf32>
    %cst_50 = arith.constant 1.000000e+00 : f32
    %157 = vector.broadcast %cst_50 : f32 to vector<8x384xf32>
    %158 = arith.addf %157, %156 : vector<8x384xf32>
    %159 = arith.divf %157, %158 : vector<8x384xf32>
    %160 = vector.extract_strided_slice %159 {offsets = [0, 0], sizes = [8, 128], strides = [1, 1]} : vector<8x384xf32> to vector<8x128xf32>
    %161 = vector.extract_strided_slice %159 {offsets = [0, 128], sizes = [8, 128], strides = [1, 1]} : vector<8x384xf32> to vector<8x128xf32>
    %162 = vector.extract_strided_slice %159 {offsets = [0, 256], sizes = [8, 128], strides = [1, 1]} : vector<8x384xf32> to vector<8x128xf32>
    %163 = vector.extract_strided_slice %153 {offsets = [0, 384], sizes = [8, 128], strides = [1, 1]} : vector<8x512xf32> to vector<8x128xf32>
    %164 = math.tanh %163 : vector<8x128xf32>
    %165 = arith.mulf %161, %147 : vector<8x128xf32>
    %166 = arith.mulf %160, %164 : vector<8x128xf32>
    %167 = arith.addf %165, %166 : vector<8x128xf32>
    %168 = math.tanh %167 : vector<8x128xf32>
    %169 = arith.mulf %162, %168 : vector<8x128xf32>
    %c0_51 = arith.constant 0 : index
    %c0_52 = arith.constant 0 : index
    %170 = vector.load %arg4[%c0_51, %c0_52] : memref<128x128xf32, #tpu.memory_space<vmem>>, vector<128x128xf32>
    %cst_53 = arith.constant dense<0.000000e+00> : vector<8x128xf32>
    %171 = tpu.matmul %169, %170, %cst_53 {dimension_numbers = #tpu.dot_dimension_numbers<[1], [0], [0], [1], [0, 0, 1, 1], [], []>} : vector<8x128xf32>, vector<128x128xf32>, vector<8x128xf32> -> vector<8x128xf32>
    %c0_54 = arith.constant 0 : index
    %c0_55 = arith.constant 0 : index
    %172 = vector.load %arg6[%c0_54, %c0_55] : memref<1x128xf32, #tpu.memory_space<vmem>>, vector<1x128xf32>
    %173 = vector.broadcast %172 : vector<1x128xf32> to vector<8x128xf32>
    %174 = arith.addf %171, %173 : vector<8x128xf32>
    %c0_56 = arith.constant 0 : index
    %c0_57 = arith.constant 0 : index
    %175 = vector.load %arg7[%c0_56, %c0_57] : memref<8x128xf32, #tpu.memory_space<vmem>>, vector<8x128xf32>
    tpu.vector_store %arg7[%c0_56, %c0_57], %174 {strides = array<i32>} : memref<8x128xf32, #tpu.memory_space<vmem>>, vector<8x128xf32>,
    return
  }
  func.func @transform_0(%arg0: i32) -> (i32, i32, i32) {
    %c0_i32 = arith.constant 0 : i32
    %c0_i32_0 = arith.constant 0 : i32
    %c0_i32_1 = arith.constant 0 : i32
    return %arg0, %c0_i32, %c0_i32_0 : i32, i32, i32
  }
  func.func @transform_1(%arg0: i32) -> (i32, i32) {
    %c0_i32 = arith.constant 0 : i32
    %c0_i32_0 = arith.constant 0 : i32
    %c0_i32_1 = arith.constant 0 : i32
    return %c0_i32, %c0_i32_0 : i32, i32
  }
  func.func @transform_2(%arg0: i32) -> (i32, i32) {
    %c0_i32 = arith.constant 0 : i32
    %c0_i32_0 = arith.constant 0 : i32
    %c0_i32_1 = arith.constant 0 : i32
    return %c0_i32, %c0_i32_0 : i32, i32
  }
  func.func @transform_3(%arg0: i32) -> (i32, i32) {
    %c0_i32 = arith.constant 0 : i32
    %c0_i32_0 = arith.constant 0 : i32
    %c0_i32_1 = arith.constant 0 : i32
    return %c0_i32, %c0_i32_0 : i32, i32
  }
  func.func @transform_4(%arg0: i32) -> (i32, i32) {
    %c0_i32 = arith.constant 0 : i32
    %c0_i32_0 = arith.constant 0 : i32
    %c0_i32_1 = arith.constant 0 : i32
    return %c0_i32, %c0_i32_0 : i32, i32
  }
  func.func @transform_5(%arg0: i32) -> (i32, i32) {
    %c0_i32 = arith.constant 0 : i32
    %c0_i32_0 = arith.constant 0 : i32
    %c0_i32_1 = arith.constant 0 : i32
    return %c0_i32, %c0_i32_0 : i32, i32
  }
  func.func @transform_6(%arg0: i32) -> (i32, i32) {
    %c0_i32 = arith.constant 0 : i32
    %c0_i32_0 = arith.constant 0 : i32
    return %arg0, %c0_i32 : i32, i32
  }
}

</mosaic_0001>

<llo_original>
// kernel: tpu_custom_call.1
$region0: #{tpu_custom_call.1}
  #allocation0 [shape = 'u32[]', space=smem, size = 0x4, offset = 0x4, fixed_abs, tag = 'smem constant byte address 0x4 - core index']
  #allocation1 [shape = 'u32[144,128]{1,0:T(1,128)}', space=vmem, size = 0x12000, scoped, tag = 'internal scratch']
  #allocation2 [shape = 'f32[64,512]{1,0:T(8,128)}', space=vmem, size = 0x20000, scoped, tag = 'scratch operand']
  %s0 = inlined_call_operand.vmem [shape: f32[1,64,16], index: 0, kind: input, shape index: {}]
  %s1 = inlined_call_operand.vmem [shape: f32[16,512], index: 1, kind: input, shape index: {}]
  %s2 = inlined_call_operand.hbm [shape: f32[128,512], index: 2, kind: input, shape index: {}]
  %s3 = inlined_call_operand.hbm [shape: f32[128,128], index: 3, kind: input, shape index: {}]
  %s4 = inlined_call_operand.vmem [shape: f32[1,512], index: 4, kind: input, shape index: {}]
  %s5 = inlined_call_operand.vmem [shape: f32[1,128], index: 5, kind: input, shape index: {}]
  %s6 = inlined_call_operand.hbm [shape: f32[8,128], index: 6, kind: output, shape index: {}]
  %s7 = sld [smem:[#allocation0]]
  $region42: #{tpu_custom_call.1} parent=0
    _
  %s9 = ssub.s32 1, %s7
  %s10 = scalar_select 0, %s9, %s7
  $region1: #{tpu_custom_call.1} parent=0
    #allocation3 [shape = 'u8[262144]{0}', space=vmem, size = 0x40000, scoped, tag = 'input window, operand 2, single buffered']
    #allocation4 [shape = 's32[1]{0}', space=sflag, size = 0x4, scoped, tag = 'scoped memory for tpu_custom_call.1']
    #allocation5 [shape = 's32[1]{0}', space=sflag, size = 0x4, scoped, tag = 'scoped memory for tpu_custom_call.1']
    #allocation6 [shape = 'u8[65536]{0}', space=vmem, size = 0x10000, scoped, tag = 'input window, operand 3, single buffered']
    #allocation7 [shape = 's32[1]{0}', space=sflag, size = 0x4, scoped, tag = 'scoped memory for tpu_custom_call.1']
    #allocation8 [shape = 'u8[4096]{0}', space=vmem, size = 0x1000, scoped, tag = 'output window, operand 0, single buffered']
    %11 = vsyncpa [#allocation4], 0
    %12 = vsyncpa [#allocation7], 0
    %13 = vsyncpa [#allocation5], 0
    // Predicated region
    $region2: #{tpu_custom_call.1} parent=1 // pred_check
      _
    $region3: #{tpu_custom_call.1} parent=1 // pred_check_branch
      %15 = sbr.rel (0) target = $region5
    $region4: #{tpu_custom_call.1} parent=1 // pred_region
      _
    $region5: #{tpu_custom_call.1} parent=1 // pred_fallthru
      _
    // Predicated region
    $region6: #{tpu_custom_call.1} parent=1 // pred_check
      _
    $region7: #{tpu_custom_call.1} parent=1 // pred_check_branch
      %17 = sbr.rel (0) target = $region9
    $region8: #{tpu_custom_call.1} parent=1 // pred_region
      _
    $region9: #{tpu_custom_call.1} parent=1 // pred_fallthru
      _
    // Predicated region
    $region10: #{tpu_custom_call.1} parent=1 // pred_check
      _
    $region11: #{tpu_custom_call.1} parent=1 // pred_check_branch
      %19 = sbr.rel (0) target = $region13
    $region12: #{tpu_custom_call.1} parent=1 // pred_region
      %s21 = ssub.s32 8192, 8192
      %22 = vsyncadd [#allocation4], %s21
      %s23 = sshll.u32 [#allocation3], 4
      %s24 = int_to_ptr.vmem [resolvable:$true] %s23
      %29 = dma.hbm_to_vmem [thread:$0]  %s2, 8192, %s24, [#allocation4], 512, 512, 32
    $region13: #{tpu_custom_call.1} parent=1 // pred_fallthru
      _
    // Predicated region
    $region14: #{tpu_custom_call.1} parent=1 // pred_check
      _
    $region15: #{tpu_custom_call.1} parent=1 // pred_check_branch
      %31 = sbr.rel (0) target = $region17
    $region16: #{tpu_custom_call.1} parent=1 // pred_region
      %s33 = ssub.s32 2048, 2048
      %34 = vsyncadd [#allocation7], %s33
      %s35 = sshll.u32 [#allocation6], 4
      %s36 = int_to_ptr.vmem [resolvable:$true] %s35
      %41 = dma.hbm_to_vmem [thread:$0]  %s3, 2048, %s36, [#allocation7], 128, 128, 8
    $region17: #{tpu_custom_call.1} parent=1 // pred_fallthru
      _
    // Predicated region
    $region18: #{tpu_custom_call.1} parent=1 // pred_check
      _
    $region19: #{tpu_custom_call.1} parent=1 // pred_check_branch
      %43 = sbr.rel (0) target = $region21
    $region20: #{tpu_custom_call.1} parent=1 // pred_region
      _
    $region21: #{tpu_custom_call.1} parent=1 // pred_fallthru
      _
    // Predicated region
    $region22: #{tpu_custom_call.1} parent=1 // pred_check
      _
    $region23: #{tpu_custom_call.1} parent=1 // pred_check_branch
      %45 = sbr.rel (0) target = $region25
    $region24: #{tpu_custom_call.1} parent=1 // pred_region
      _
    $region25: #{tpu_custom_call.1} parent=1 // pred_fallthru
      _
    // Predicated region
    $region26: #{tpu_custom_call.1} parent=1 // pred_check
      _
    $region27: #{tpu_custom_call.1} parent=1 // pred_check_branch
      %47 = sbr.rel (0) target = $region29
    $region28: #{tpu_custom_call.1} parent=1 // pred_region
      %48 = dma.done [#allocation4], 8192
    $region29: #{tpu_custom_call.1} parent=1 // pred_fallthru
      _
    // Predicated region
    $region30: #{tpu_custom_call.1} parent=1 // pred_check
      _
    $region31: #{tpu_custom_call.1} parent=1 // pred_check_branch
      %50 = sbr.rel (0) target = $region33
    $region32: #{tpu_custom_call.1} parent=1 // pred_region
      %51 = dma.done [#allocation7], 2048
    $region33: #{tpu_custom_call.1} parent=1 // pred_fallthru
      _
    %v52 = vld [vmem:[%s0] sm:$0xff]
    %v53 = vld [vmem:[%s0 + $0x8] sm:$0xff]
    %v54 = vld [vmem:[%s0 + $0x10] sm:$0xff]
    %v55 = vld [vmem:[%s0 + $0x18] sm:$0xff]
    %v56 = vld [vmem:[%s0 + $0x20] sm:$0xff]
    %v57 = vld [vmem:[%s0 + $0x28] sm:$0xff]
    %v58 = vld [vmem:[%s0 + $0x30] sm:$0xff]
    %v59 = vld [vmem:[%s0 + $0x38] sm:$0xff]
    %v60 = vld [vmem:[%s1] sm:$0xff]
    %v61 = vld [vmem:[%s1 + $0x8] sm:$0xff]
    %v62 = vld [vmem:[%s1 + $0x10] sm:$0xff]
    %v63 = vld [vmem:[%s1 + $0x18] sm:$0xff]
    %v64 = vld [vmem:[%s1 + $0x20] sm:$0xff]
    %v65 = vld [vmem:[%s1 + $0x28] sm:$0xff]
    %v66 = vld [vmem:[%s1 + $0x30] sm:$0xff]
    %v67 = vld [vmem:[%s1 + $0x38] sm:$0xff]
    %v68 = vld [vmem:[%s4] sm:$0xf]
    %v70 = vlaneseq
    %v71 = vshrl.u32 %v70, 7
    %v72 = vsub.s32 0, %v71
    %v73 = vrot.slane %v68, %v72
    %v74 = vlaneseq
    %v75 = vshrl.u32 %v74, 7
    %v76 = vsub.s32 1, %v75
    %v77 = vrot.slane %v68, %v76
    %v78 = vlaneseq
    %v79 = vshrl.u32 %v78, 7
    %v80 = vsub.s32 2, %v79
    %v81 = vrot.slane %v68, %v80
    %v82 = vlaneseq
    %v83 = vshrl.u32 %v82, 7
    %v84 = vsub.s32 3, %v83
    %v85 = vrot.slane %v68, %v84
    %vm90 = vcmask 130048
    %v92 = vsel %vm90, %v52, 0
    %v95 = vsel %vm90, %v53, 0
    %v98 = vsel %vm90, %v54, 0
    %v101 = vsel %vm90, %v55, 0
    %v104 = vsel %vm90, %v56, 0
    %v107 = vsel %vm90, %v57, 0
    %v110 = vsel %vm90, %v58, 0
    %v113 = vsel %vm90, %v59, 0
    %115 = vmatprep.subr.mxu0 %v61
    %116 = vmatpush1.msra.mxu0 %v60
    %117 = vmatprep.subr.mxu0 %v65
    %118 = vmatpush1.msra.mxu0 %v64
    %119 = vmatprep.subr.mxu0 0.0
    %120 = vmatpush1.msra.mxu0 0.0
    %121 = vmatprep.subr.mxu0 0.0
    %122 = vmatpush1.msra.mxu0 0.0
    %123 = vmatprep.subr.mxu0 0.0
    %124 = vmatpush1.msra.mxu0 0.0
    %125 = vmatprep.subr.mxu0 0.0
    %126 = vmatpush1.msra.mxu0 0.0
    %127 = vmatprep.subr.mxu0 0.0
    %128 = vmatpush1.msra.mxu0 0.0
    %129 = vmatprep.subr.mxu0 0.0
    %130 = vmatpush1.msra.mxu0 0.0
    %131 = vmatprep.subr.mxu0 0.0
    %132 = vmatpush1.msra.mxu0 0.0
    %133 = vmatprep.subr.mxu0 0.0
    %134 = vmatpush1.msra.mxu0 0.0
    %135 = vmatprep.subr.mxu0 0.0
    %136 = vmatpush1.msra.mxu0 0.0
    %137 = vmatprep.subr.mxu0 0.0
    %138 = vmatpush1.msra.mxu0 0.0
    %139 = vmatprep.subr.mxu0 0.0
    %140 = vmatpush1.msra.mxu0 0.0
    %141 = vmatprep.subr.mxu0 0.0
    %142 = vmatpush1.msra.mxu0 0.0
    %143 = vmatprep.subr.mxu0 0.0
    %144 = vmatpush1.msra.mxu0 0.0
    %145 = vmatprep.subr.mxu0 0.0
    %146 = vmatpush1.msra.mxu0 0.0
    %147 = vmatprep.subr.mxu0 0.0
    %148 = vmatpush1.msra.mxu0 0.0
    %149 = vmatprep.subr.mxu0 0.0
    %150 = vmatpush1.msra.mxu0 0.0
    %151 = vmatprep.subr.mxu0 0.0
    %152 = vmatpush1.msra.mxu0 0.0
    %153 = vmatprep.subr.mxu0 0.0
    %154 = vmatpush1.msra.mxu0 0.0
    %155 = vmatprep.subr.mxu0 0.0
    %156 = vmatpush1.msra.mxu0 0.0
    %157 = vmatprep.subr.mxu0 0.0
    %158 = vmatpush1.msra.mxu0 0.0
    %159 = vmatprep.subr.mxu0 0.0
    %160 = vmatpush1.msra.mxu0 0.0
    %161 = vmatprep.subr.mxu0 0.0
    %162 = vmatpush1.msra.mxu0 0.0
    %163 = vmatprep.subr.mxu0 0.0
    %164 = vmatpush1.msra.mxu0 0.0
    %165 = vmatprep.subr.mxu0 0.0
    %166 = vmatpush1.msra.mxu0 0.0
    %167 = vmatprep.subr.mxu0 0.0
    %168 = vmatpush1.msra.mxu0 0.0
    %169 = vmatprep.subr.mxu0 0.0
    %170 = vmatpush1.msra.mxu0 0.0
    %171 = vmatprep.subr.mxu0 0.0
    %172 = vmatpush1.msra.mxu0 0.0
    %173 = vmatprep.subr.mxu0 0.0
    %174 = vmatpush1.msra.mxu0 0.0
    %175 = vmatprep.subr.mxu0 0.0
    %176 = vmatpush1.msra.mxu0 0.0
    %177 = vmatprep.subr.mxu0 0.0
    %178 = vmatpush1.msra.mxu0 0.0
    %179 = vmatprep.mubr.f32.mxu0 0.0
    %180 = vmatmul.mubr.f32.gmra.mrb[0].mxu0 %v92
    %v181 = vpop.f32.mrb[0].mxu0
    %v182 = vadd.f32 %v73, %v181
    %v183 = vpop.f32.mrb[0].mxu0
    %v184 = vadd.f32 %v77, %v183
    %185 = vmatprep.mubr.f32.mxu0 0.0
    %186 = vmatmul.mubr.f32.gmra.mrb[0].mxu0 %v95
    %v187 = vpop.f32.mrb[0].mxu0
    %v188 = vadd.f32 %v73, %v187
    %v189 = vpop.f32.mrb[0].mxu0
    %v190 = vadd.f32 %v77, %v189
    %191 = vmatprep.mubr.f32.mxu0 0.0
    %192 = vmatmul.mubr.f32.gmra.mrb[0].mxu0 %v98
    %v193 = vpop.f32.mrb[0].mxu0
    %v194 = vadd.f32 %v73, %v193
    %v195 = vpop.f32.mrb[0].mxu0
    %v196 = vadd.f32 %v77, %v195
    %197 = vmatprep.mubr.f32.mxu0 0.0
    %198 = vmatmul.mubr.f32.gmra.mrb[0].mxu0 %v101
    %v199 = vpop.f32.mrb[0].mxu0
    %v200 = vadd.f32 %v73, %v199
    %v201 = vpop.f32.mrb[0].mxu0
    %v202 = vadd.f32 %v77, %v201
    %203 = vmatprep.mubr.f32.mxu0 0.0
    %204 = vmatmul.mubr.f32.gmra.mrb[0].mxu0 %v104
    %v205 = vpop.f32.mrb[0].mxu0
    %v206 = vadd.f32 %v73, %v205
    %v207 = vpop.f32.mrb[0].mxu0
    %v208 = vadd.f32 %v77, %v207
    %209 = vmatprep.mubr.f32.mxu0 0.0
    %210 = vmatmul.mubr.f32.gmra.mrb[0].mxu0 %v107
    %v211 = vpop.f32.mrb[0].mxu0
    %v212 = vadd.f32 %v73, %v211
    %v213 = vpop.f32.mrb[0].mxu0
    %v214 = vadd.f32 %v77, %v213
    %215 = vmatprep.mubr.f32.mxu0 0.0
    %216 = vmatmul.mubr.f32.gmra.mrb[0].mxu0 %v110
    %v217 = vpop.f32.mrb[0].mxu0
    %v218 = vadd.f32 %v73, %v217
    %v219 = vpop.f32.mrb[0].mxu0
    %v220 = vadd.f32 %v77, %v219
    %221 = vmatprep.mubr.f32.mxu0 0.0
    %222 = vmatmul.mubr.f32.gmra.mrb[0].mxu0 %v113
    %v223 = vpop.f32.mrb[0].mxu0
    %v224 = vadd.f32 %v73, %v223
    %v225 = vpop.f32.mrb[0].mxu0
    %v226 = vadd.f32 %v77, %v225
    %227 = vdwg.mxu0
    %228 = vmatprep.subr.mxu0 %v63
    %229 = vmatpush1.msra.mxu0 %v62
    %230 = vmatprep.subr.mxu0 %v67
    %231 = vmatpush1.msra.mxu0 %v66
    %232 = vmatprep.subr.mxu0 0.0
    %233 = vmatpush1.msra.mxu0 0.0
    %234 = vmatprep.subr.mxu0 0.0
    %235 = vmatpush1.msra.mxu0 0.0
    %236 = vmatprep.subr.mxu0 0.0
    %237 = vmatpush1.msra.mxu0 0.0
    %238 = vmatprep.subr.mxu0 0.0
    %239 = vmatpush1.msra.mxu0 0.0
    %240 = vmatprep.subr.mxu0 0.0
    %241 = vmatpush1.msra.mxu0 0.0
    %242 = vmatprep.subr.mxu0 0.0
    %243 = vmatpush1.msra.mxu0 0.0
    %244 = vmatprep.subr.mxu0 0.0
    %245 = vmatpush1.msra.mxu0 0.0
    %246 = vmatprep.subr.mxu0 0.0
    %247 = vmatpush1.msra.mxu0 0.0
    %248 = vmatprep.subr.mxu0 0.0
    %249 = vmatpush1.msra.mxu0 0.0
    %250 = vmatprep.subr.mxu0 0.0
    %251 = vmatpush1.msra.mxu0 0.0
    %252 = vmatprep.subr.mxu0 0.0
    %253 = vmatpush1.msra.mxu0 0.0
    %254 = vmatprep.subr.mxu0 0.0
    %255 = vmatpush1.msra.mxu0 0.0
    %256 = vmatprep.subr.mxu0 0.0
    %257 = vmatpush1.msra.mxu0 0.0
    %258 = vmatprep.subr.mxu0 0.0
    %259 = vmatpush1.msra.mxu0 0.0
    %260 = vmatprep.subr.mxu0 0.0
    %261 = vmatpush1.msra.mxu0 0.0
    %262 = vmatprep.subr.mxu0 0.0
    %263 = vmatpush1.msra.mxu0 0.0
    %264 = vmatprep.subr.mxu0 0.0
    %265 = vmatpush1.msra.mxu0 0.0
    %266 = vmatprep.subr.mxu0 0.0
    %267 = vmatpush1.msra.mxu0 0.0
    %268 = vmatprep.subr.mxu0 0.0
    %269 = vmatpush1.msra.mxu0 0.0
    %270 = vmatprep.subr.mxu0 0.0
    %271 = vmatpush1.msra.mxu0 0.0
    %272 = vmatprep.subr.mxu0 0.0
    %273 = vmatpush1.msra.mxu0 0.0
    %274 = vmatprep.subr.mxu0 0.0
    %275 = vmatpush1.msra.mxu0 0.0
    %276 = vmatprep.subr.mxu0 0.0
    %277 = vmatpush1.msra.mxu0 0.0
    %278 = vmatprep.subr.mxu0 0.0
    %279 = vmatpush1.msra.mxu0 0.0
    %280 = vmatprep.subr.mxu0 0.0
    %281 = vmatpush1.msra.mxu0 0.0
    %282 = vmatprep.subr.mxu0 0.0
    %283 = vmatpush1.msra.mxu0 0.0
    %284 = vmatprep.subr.mxu0 0.0
    %285 = vmatpush1.msra.mxu0 0.0
    %286 = vmatprep.subr.mxu0 0.0
    %287 = vmatpush1.msra.mxu0 0.0
    %288 = vmatprep.subr.mxu0 0.0
    %289 = vmatpush1.msra.mxu0 0.0
    %290 = vmatprep.subr.mxu0 0.0
    %291 = vmatpush1.msra.mxu0 0.0
    %292 = vmatprep.mubr.f32.mxu0 0.0
    %293 = vmatmul.mubr.f32.gmra.mrb[0].mxu0 %v92
    %v294 = vpop.f32.mrb[0].mxu0
    %v295 = vadd.f32 %v81, %v294
    %v296 = vpop.f32.mrb[0].mxu0
    %v297 = vadd.f32 %v85, %v296
    %298 = vmatprep.mubr.f32.mxu0 0.0
    %299 = vmatmul.mubr.f32.gmra.mrb[0].mxu0 %v95
    %v300 = vpop.f32.mrb[0].mxu0
    %v301 = vadd.f32 %v81, %v300
    %v302 = vpop.f32.mrb[0].mxu0
    %v303 = vadd.f32 %v85, %v302
    %304 = vmatprep.mubr.f32.mxu0 0.0
    %305 = vmatmul.mubr.f32.gmra.mrb[0].mxu0 %v98
    %v306 = vpop.f32.mrb[0].mxu0
    %v307 = vadd.f32 %v81, %v306
    %v308 = vpop.f32.mrb[0].mxu0
    %v309 = vadd.f32 %v85, %v308
    %310 = vmatprep.mubr.f32.mxu0 0.0
    %311 = vmatmul.mubr.f32.gmra.mrb[0].mxu0 %v101
    %v312 = vpop.f32.mrb[0].mxu0
    %v313 = vadd.f32 %v81, %v312
    %v314 = vpop.f32.mrb[0].mxu0
    %v315 = vadd.f32 %v85, %v314
    %316 = vmatprep.mubr.f32.mxu0 0.0
    %317 = vmatmul.mubr.f32.gmra.mrb[0].mxu0 %v104
    %v318 = vpop.f32.mrb[0].mxu0
    %v319 = vadd.f32 %v81, %v318
    %v320 = vpop.f32.mrb[0].mxu0
    %v321 = vadd.f32 %v85, %v320
    %322 = vmatprep.mubr.f32.mxu0 0.0
    %323 = vmatmul.mubr.f32.gmra.mrb[0].mxu0 %v107
    %v324 = vpop.f32.mrb[0].mxu0
    %v325 = vadd.f32 %v81, %v324
    %v326 = vpop.f32.mrb[0].mxu0
    %v327 = vadd.f32 %v85, %v326
    %328 = vmatprep.mubr.f32.mxu0 0.0
    %329 = vmatmul.mubr.f32.gmra.mrb[0].mxu0 %v110
    %v330 = vpop.f32.mrb[0].mxu0
    %v331 = vadd.f32 %v81, %v330
    %v332 = vpop.f32.mrb[0].mxu0
    %v333 = vadd.f32 %v85, %v332
    %334 = vmatprep.mubr.f32.mxu0 0.0
    %335 = vmatmul.mubr.f32.gmra.mrb[0].mxu0 %v113
    %v336 = vpop.f32.mrb[0].mxu0
    %v337 = vadd.f32 %v81, %v336
    %v338 = vpop.f32.mrb[0].mxu0
    %v339 = vadd.f32 %v85, %v338
    %340 = vdwg.mxu0
    %341 = vst [vmem:[#allocation2] sm:$0xff] %v182
    %342 = vst [vmem:[#allocation2 + $0x8] sm:$0xff] %v184
    %343 = vst [vmem:[#allocation2 + $0x10] sm:$0xff] %v295
    %344 = vst [vmem:[#allocation2 + $0x18] sm:$0xff] %v297
    %345 = vst [vmem:[#allocation2 + $0x20] sm:$0xff] %v188
    %346 = vst [vmem:[#allocation2 + $0x28] sm:$0xff] %v190
    %347 = vst [vmem:[#allocation2 + $0x30] sm:$0xff] %v301
    %348 = vst [vmem:[#allocation2 + $0x38] sm:$0xff] %v303
    %349 = vst [vmem:[#allocation2 + $0x40] sm:$0xff] %v194
    %350 = vst [vmem:[#allocation2 + $0x48] sm:$0xff] %v196
    %351 = vst [vmem:[#allocation2 + $0x50] sm:$0xff] %v307
    %352 = vst [vmem:[#allocation2 + $0x58] sm:$0xff] %v309
    %353 = vst [vmem:[#allocation2 + $0x60] sm:$0xff] %v200
    %354 = vst [vmem:[#allocation2 + $0x68] sm:$0xff] %v202
    %355 = vst [vmem:[#allocation2 + $0x70] sm:$0xff] %v313
    %356 = vst [vmem:[#allocation2 + $0x78] sm:$0xff] %v315
    %357 = vst [vmem:[#allocation2 + $0x80] sm:$0xff] %v206
    %358 = vst [vmem:[#allocation2 + $0x88] sm:$0xff] %v208
    %359 = vst [vmem:[#allocation2 + $0x90] sm:$0xff] %v319
    %360 = vst [vmem:[#allocation2 + $0x98] sm:$0xff] %v321
    %361 = vst [vmem:[#allocation2 + $0xa0] sm:$0xff] %v212
    %362 = vst [vmem:[#allocation2 + $0xa8] sm:$0xff] %v214
    %363 = vst [vmem:[#allocation2 + $0xb0] sm:$0xff] %v325
    %364 = vst [vmem:[#allocation2 + $0xb8] sm:$0xff] %v327
    %365 = vst [vmem:[#allocation2 + $0xc0] sm:$0xff] %v218
    %366 = vst [vmem:[#allocation2 + $0xc8] sm:$0xff] %v220
    %367 = vst [vmem:[#allocation2 + $0xd0] sm:$0xff] %v331
    %368 = vst [vmem:[#allocation2 + $0xd8] sm:$0xff] %v333
    %369 = vst [vmem:[#allocation2 + $0xe0] sm:$0xff] %v224
    %370 = vst [vmem:[#allocation2 + $0xe8] sm:$0xff] %v226
    %371 = vst [vmem:[#allocation2 + $0xf0] sm:$0xff] %v337
    %372 = vst [vmem:[#allocation2 + $0xf8] sm:$0xff] %v339
    %v373 = vld [vmem:[#allocation2] sm:$0xff]
    %v374 = vld [vmem:[#allocation2 + $0x8] sm:$0xff]
    %v375 = vld [vmem:[#allocation2 + $0x10] sm:$0xff]
    %v376 = vld [vmem:[#allocation2 + $0x18] sm:$0xff]
    %v377 = vld [vmem:[#allocation3] sm:$0xff]
    %v378 = vld [vmem:[#allocation3 + $0x8] sm:$0xff]
    %v379 = vld [vmem:[#allocation3 + $0x10] sm:$0xff]
    %v380 = vld [vmem:[#allocation3 + $0x18] sm:$0xff]
    %v381 = vld [vmem:[#allocation3 + $0x20] sm:$0xff]
    %v382 = vld [vmem:[#allocation3 + $0x28] sm:$0xff]
    %v383 = vld [vmem:[#allocation3 + $0x30] sm:$0xff]
    %v384 = vld [vmem:[#allocation3 + $0x38] sm:$0xff]
    %v385 = vld [vmem:[#allocation3 + $0x40] sm:$0xff]
    %v386 = vld [vmem:[#allocation3 + $0x48] sm:$0xff]
    %v387 = vld [vmem:[#allocation3 + $0x50] sm:$0xff]
    %v388 = vld [vmem:[#allocation3 + $0x58] sm:$0xff]
    %v389 = vld [vmem:[#allocation3 + $0x60] sm:$0xff]
    %v390 = vld [vmem:[#allocation3 + $0x68] sm:$0xff]
    %v391 = vld [vmem:[#allocation3 + $0x70] sm:$0xff]
    %v392 = vld [vmem:[#allocation3 + $0x78] sm:$0xff]
    %v393 = vld [vmem:[#allocation3 + $0x80] sm:$0xff]
    %v394 = vld [vmem:[#allocation3 + $0x88] sm:$0xff]
    %v395 = vld [vmem:[#allocation3 + $0x90] sm:$0xff]
    %v396 = vld [vmem:[#allocation3 + $0x98] sm:$0xff]
    %v397 = vld [vmem:[#allocation3 + $0xa0] sm:$0xff]
    %v398 = vld [vmem:[#allocation3 + $0xa8] sm:$0xff]
    %v399 = vld [vmem:[#allocation3 + $0xb0] sm:$0xff]
    %v400 = vld [vmem:[#allocation3 + $0xb8] sm:$0xff]
    %v401 = vld [vmem:[#allocation3 + $0xc0] sm:$0xff]
    %v402 = vld [vmem:[#allocation3 + $0xc8] sm:$0xff]
    %v403 = vld [vmem:[#allocation3 + $0xd0] sm:$0xff]
    %v404 = vld [vmem:[#allocation3 + $0xd8] sm:$0xff]
    %v405 = vld [vmem:[#allocation3 + $0xe0] sm:$0xff]
    %v406 = vld [vmem:[#allocation3 + $0xe8] sm:$0xff]
    %v407 = vld [vmem:[#allocation3 + $0xf0] sm:$0xff]
    %v408 = vld [vmem:[#allocation3 + $0xf8] sm:$0xff]
    %v409 = vld [vmem:[#allocation3 + $0x100] sm:$0xff]
    %v410 = vld [vmem:[#allocation3 + $0x108] sm:$0xff]
    %v411 = vld [vmem:[#allocation3 + $0x110] sm:$0xff]
    %v412 = vld [vmem:[#allocation3 + $0x118] sm:$0xff]
    %v413 = vld [vmem:[#allocation3 + $0x120] sm:$0xff]
    %v414 = vld [vmem:[#allocation3 + $0x128] sm:$0xff]
    %v415 = vld [vmem:[#allocation3 + $0x130] sm:$0xff]
    %v416 = vld [vmem:[#allocation3 + $0x138] sm:$0xff]
    %v417 = vld [vmem:[#allocation3 + $0x140] sm:$0xff]
    %v418 = vld [vmem:[#allocation3 + $0x148] sm:$0xff]
    %v419 = vld [vmem:[#allocation3 + $0x150] sm:$0xff]
    %v420 = vld [vmem:[#allocation3 + $0x158] sm:$0xff]
    %v421 = vld [vmem:[#allocation3 + $0x160] sm:$0xff]
    %v422 = vld [vmem:[#allocation3 + $0x168] sm:$0xff]
    %v423 = vld [vmem:[#allocation3 + $0x170] sm:$0xff]
    %v424 = vld [vmem:[#allocation3 + $0x178] sm:$0xff]
    %v425 = vld [vmem:[#allocation3 + $0x180] sm:$0xff]
    %v426 = vld [vmem:[#allocation3 + $0x188] sm:$0xff]
    %v427 = vld [vmem:[#allocation3 + $0x190] sm:$0xff]
    %v428 = vld [vmem:[#allocation3 + $0x198] sm:$0xff]
    %v429 = vld [vmem:[#allocation3 + $0x1a0] sm:$0xff]
    %v430 = vld [vmem:[#allocation3 + $0x1a8] sm:$0xff]
    %v431 = vld [vmem:[#allocation3 + $0x1b0] sm:$0xff]
    %v432 = vld [vmem:[#allocation3 + $0x1b8] sm:$0xff]
    %v433 = vld [vmem:[#allocation3 + $0x1c0] sm:$0xff]
    %v434 = vld [vmem:[#allocation3 + $0x1c8] sm:$0xff]
    %v435 = vld [vmem:[#allocation3 + $0x1d0] sm:$0xff]
    %v436 = vld [vmem:[#allocation3 + $0x1d8] sm:$0xff]
    %v437 = vld [vmem:[#allocation3 + $0x1e0] sm:$0xff]
    %v438 = vld [vmem:[#allocation3 + $0x1e8] sm:$0xff]
    %v439 = vld [vmem:[#allocation3 + $0x1f0] sm:$0xff]
    %v440 = vld [vmem:[#allocation3 + $0x1f8] sm:$0xff]
    %441 = vmatprep.subr.mxu0 %v378
    %442 = vmatpush1.msra.mxu0 %v377
    %443 = vmatprep.subr.mxu0 %v382
    %444 = vmatpush1.msra.mxu0 %v381
    %445 = vmatprep.subr.mxu0 %v386
    %446 = vmatpush1.msra.mxu0 %v385
    %447 = vmatprep.subr.mxu0 %v390
    %448 = vmatpush1.msra.mxu0 %v389
    %449 = vmatprep.subr.mxu0 %v394
    %450 = vmatpush1.msra.mxu0 %v393
    %451 = vmatprep.subr.mxu0 %v398
    %452 = vmatpush1.msra.mxu0 %v397
    %453 = vmatprep.subr.mxu0 %v402
    %454 = vmatpush1.msra.mxu0 %v401
    %455 = vmatprep.subr.mxu0 %v406
    %456 = vmatpush1.msra.mxu0 %v405
    %457 = vmatprep.subr.mxu0 %v410
    %458 = vmatpush1.msra.mxu0 %v409
    %459 = vmatprep.subr.mxu0 %v414
    %460 = vmatpush1.msra.mxu0 %v413
    %461 = vmatprep.subr.mxu0 %v418
    %462 = vmatpush1.msra.mxu0 %v417
    %463 = vmatprep.subr.mxu0 %v422
    %464 = vmatpush1.msra.mxu0 %v421
    %465 = vmatprep.subr.mxu0 %v426
    %466 = vmatpush1.msra.mxu0 %v425
    %467 = vmatprep.subr.mxu0 %v430
    %468 = vmatpush1.msra.mxu0 %v429
    %469 = vmatprep.subr.mxu0 %v434
    %470 = vmatpush1.msra.mxu0 %v433
    %471 = vmatprep.subr.mxu0 %v438
    %472 = vmatpush1.msra.mxu0 %v437
    %473 = vmatprep.subr.mxu0 0.0
    %474 = vmatpush1.msra.mxu0 0.0
    %475 = vmatprep.subr.mxu0 0.0
    %476 = vmatpush1.msra.mxu0 0.0
    %477 = vmatprep.subr.mxu0 0.0
    %478 = vmatpush1.msra.mxu0 0.0
    %479 = vmatprep.subr.mxu0 0.0
    %480 = vmatpush1.msra.mxu0 0.0
    %481 = vmatprep.subr.mxu0 0.0
    %482 = vmatpush1.msra.mxu0 0.0
    %483 = vmatprep.subr.mxu0 0.0
    %484 = vmatpush1.msra.mxu0 0.0
    %485 = vmatprep.subr.mxu0 0.0
    %486 = vmatpush1.msra.mxu0 0.0
    %487 = vmatprep.subr.mxu0 0.0
    %488 = vmatpush1.msra.mxu0 0.0
    %489 = vmatprep.subr.mxu0 0.0
    %490 = vmatpush1.msra.mxu0 0.0
    %491 = vmatprep.subr.mxu0 0.0
    %492 = vmatpush1.msra.mxu0 0.0
    %493 = vmatprep.subr.mxu0 0.0
    %494 = vmatpush1.msra.mxu0 0.0
    %495 = vmatprep.subr.mxu0 0.0
    %496 = vmatpush1.msra.mxu0 0.0
    %497 = vmatprep.subr.mxu0 0.0
    %498 = vmatpush1.msra.mxu0 0.0
    %499 = vmatprep.subr.mxu0 0.0
    %500 = vmatpush1.msra.mxu0 0.0
    %501 = vmatprep.subr.mxu0 0.0
    %502 = vmatpush1.msra.mxu0 0.0
    %503 = vmatprep.subr.mxu0 0.0
    %504 = vmatpush1.msra.mxu0 0.0
    %505 = vmatprep.mubr.f32.mxu0 0.0
    %506 = vmatmul.mubr.f32.gmra.mrb[0].mxu0 0.0
    %v507 = vpop.f32.mrb[0].mxu0
    %v508 = vadd.f32 0.0, %v507
    %v509 = vpop.f32.mrb[0].mxu0
    %v510 = vadd.f32 0.0, %v509
    %511 = vdwg.mxu0
    %512 = vmatprep.subr.mxu0 %v380
    %513 = vmatpush1.msra.mxu0 %v379
    %514 = vmatprep.subr.mxu0 %v384
    %515 = vmatpush1.msra.mxu0 %v383
    %516 = vmatprep.subr.mxu0 %v388
    %517 = vmatpush1.msra.mxu0 %v387
    %518 = vmatprep.subr.mxu0 %v392
    %519 = vmatpush1.msra.mxu0 %v391
    %520 = vmatprep.subr.mxu0 %v396
    %521 = vmatpush1.msra.mxu0 %v395
    %522 = vmatprep.subr.mxu0 %v400
    %523 = vmatpush1.msra.mxu0 %v399
    %524 = vmatprep.subr.mxu0 %v404
    %525 = vmatpush1.msra.mxu0 %v403
    %526 = vmatprep.subr.mxu0 %v408
    %527 = vmatpush1.msra.mxu0 %v407
    %528 = vmatprep.subr.mxu0 %v412
    %529 = vmatpush1.msra.mxu0 %v411
    %530 = vmatprep.subr.mxu0 %v416
    %531 = vmatpush1.msra.mxu0 %v415
    %532 = vmatprep.subr.mxu0 %v420
    %533 = vmatpush1.msra.mxu0 %v419
    %534 = vmatprep.subr.mxu0 %v424
    %535 = vmatpush1.msra.mxu0 %v423
    %536 = vmatprep.subr.mxu0 %v428
    %537 = vmatpush1.msra.mxu0 %v427
    %538 = vmatprep.subr.mxu0 %v432
    %539 = vmatpush1.msra.mxu0 %v431
    %540 = vmatprep.subr.mxu0 %v436
    %541 = vmatpush1.msra.mxu0 %v435
    %542 = vmatprep.subr.mxu0 %v440
    %543 = vmatpush1.msra.mxu0 %v439
    %544 = vmatprep.subr.mxu0 0.0
    %545 = vmatpush1.msra.mxu0 0.0
    %546 = vmatprep.subr.mxu0 0.0
    %547 = vmatpush1.msra.mxu0 0.0
    %548 = vmatprep.subr.mxu0 0.0
    %549 = vmatpush1.msra.mxu0 0.0
    %550 = vmatprep.subr.mxu0 0.0
    %551 = vmatpush1.msra.mxu0 0.0
    %552 = vmatprep.subr.mxu0 0.0
    %553 = vmatpush1.msra.mxu0 0.0
    %554 = vmatprep.subr.mxu0 0.0
    %555 = vmatpush1.msra.mxu0 0.0
    %556 = vmatprep.subr.mxu0 0.0
    %557 = vmatpush1.msra.mxu0 0.0
    %558 = vmatprep.subr.mxu0 0.0
    %559 = vmatpush1.msra.mxu0 0.0
    %560 = vmatprep.subr.mxu0 0.0
    %561 = vmatpush1.msra.mxu0 0.0
    %562 = vmatprep.subr.mxu0 0.0
    %563 = vmatpush1.msra.mxu0 0.0
    %564 = vmatprep.subr.mxu0 0.0
    %565 = vmatpush1.msra.mxu0 0.0
    %566 = vmatprep.subr.mxu0 0.0
    %567 = vmatpush1.msra.mxu0 0.0
    %568 = vmatprep.subr.mxu0 0.0
    %569 = vmatpush1.msra.mxu0 0.0
    %570 = vmatprep.subr.mxu0 0.0
    %571 = vmatpush1.msra.mxu0 0.0
    %572 = vmatprep.subr.mxu0 0.0
    %573 = vmatpush1.msra.mxu0 0.0
    %574 = vmatprep.subr.mxu0 0.0
    %575 = vmatpush1.msra.mxu0 0.0
    %576 = vmatprep.mubr.f32.mxu0 0.0
    %577 = vmatmul.mubr.f32.gmra.mrb[0].mxu0 0.0
    %v578 = vpop.f32.mrb[0].mxu0
    %v579 = vadd.f32 0.0, %v578
    %v580 = vpop.f32.mrb[0].mxu0
    %v581 = vadd.f32 0.0, %v580
    %582 = vdwg.mxu0
    %v583 = vadd.f32 %v373, %v508
    %v584 = vadd.f32 %v374, %v510
    %v585 = vadd.f32 %v375, %v579
    %v586 = vadd.f32 %v376, %v581
    %v587 = vxor.u32 %v583, 2147483648
    %v588 = vxor.u32 %v584, 2147483648
    %v589 = vxor.u32 %v585, 2147483648
    %v590 = vmul.f32 %v587, 1.442695
    %v591 = vpow.pop %v590
    %v592 = vmul.f32 %v588, 1.442695
    %v593 = vpow.pop %v592
    %v594 = vmul.f32 %v589, 1.442695
    %v595 = vpow.pop %v594
    %v596 = vadd.f32 %v591, 1.0
    %v597 = vadd.f32 %v593, 1.0
    %v598 = vadd.f32 %v595, 1.0
    %v599 = vrcp.pop %v596
    %v600 = vmul.f32 1.0, %v599
    %v601 = vrcp.pop %v597
    %v602 = vmul.f32 1.0, %v601
    %v603 = vrcp.pop %v598
    %v604 = vmul.f32 1.0, %v603
    %v605 = vtanh.pop %v586
    %v606 = vmul.f32 %v602, 0.0
    %v607 = vmul.f32 %v600, %v605
    %v608 = vadd.f32 %v606, %v607
    %v609 = vtanh.pop %v608
    %v610 = vmul.f32 %v604, %v609
    %v611 = vld [vmem:[#allocation2 + $0x20] sm:$0xff]
    %v612 = vld [vmem:[#allocation2 + $0x28] sm:$0xff]
    %v613 = vld [vmem:[#allocation2 + $0x30] sm:$0xff]
    %v614 = vld [vmem:[#allocation2 + $0x38] sm:$0xff]
    %615 = vmatprep.subr.mxu0 %v378
    %616 = vmatpush1.msra.mxu0 %v377
    %617 = vmatprep.subr.mxu0 %v382
    %618 = vmatpush1.msra.mxu0 %v381
    %619 = vmatprep.subr.mxu0 %v386
    %620 = vmatpush1.msra.mxu0 %v385
    %621 = vmatprep.subr.mxu0 %v390
    %622 = vmatpush1.msra.mxu0 %v389
    %623 = vmatprep.subr.mxu0 %v394
    %624 = vmatpush1.msra.mxu0 %v393
    %625 = vmatprep.subr.mxu0 %v398
    %626 = vmatpush1.msra.mxu0 %v397
    %627 = vmatprep.subr.mxu0 %v402
    %628 = vmatpush1.msra.mxu0 %v401
    %629 = vmatprep.subr.mxu0 %v406
    %630 = vmatpush1.msra.mxu0 %v405
    %631 = vmatprep.subr.mxu0 %v410
    %632 = vmatpush1.msra.mxu0 %v409
    %633 = vmatprep.subr.mxu0 %v414
    %634 = vmatpush1.msra.mxu0 %v413
    %635 = vmatprep.subr.mxu0 %v418
    %636 = vmatpush1.msra.mxu0 %v417
    %637 = vmatprep.subr.mxu0 %v422
    %638 = vmatpush1.msra.mxu0 %v421
    %639 = vmatprep.subr.mxu0 %v426
    %640 = vmatpush1.msra.mxu0 %v425
    %641 = vmatprep.subr.mxu0 %v430
    %642 = vmatpush1.msra.mxu0 %v429
    %643 = vmatprep.subr.mxu0 %v434
    %644 = vmatpush1.msra.mxu0 %v433
    %645 = vmatprep.subr.mxu0 %v438
    %646 = vmatpush1.msra.mxu0 %v437
    %647 = vmatprep.subr.mxu0 0.0
    %648 = vmatpush1.msra.mxu0 0.0
    %649 = vmatprep.subr.mxu0 0.0
    %650 = vmatpush1.msra.mxu0 0.0
    %651 = vmatprep.subr.mxu0 0.0
    %652 = vmatpush1.msra.mxu0 0.0
    %653 = vmatprep.subr.mxu0 0.0
    %654 = vmatpush1.msra.mxu0 0.0
    %655 = vmatprep.subr.mxu0 0.0
    %656 = vmatpush1.msra.mxu0 0.0
    %657 = vmatprep.subr.mxu0 0.0
    %658 = vmatpush1.msra.mxu0 0.0
    %659 = vmatprep.subr.mxu0 0.0
    %660 = vmatpush1.msra.mxu0 0.0
    %661 = vmatprep.subr.mxu0 0.0
    %662 = vmatpush1.msra.mxu0 0.0
    %663 = vmatprep.subr.mxu0 0.0
    %664 = vmatpush1.msra.mxu0 0.0
    %665 = vmatprep.subr.mxu0 0.0
    %666 = vmatpush1.msra.mxu0 0.0
    %667 = vmatprep.subr.mxu0 0.0
    %668 = vmatpush1.msra.mxu0 0.0
    %669 = vmatprep.subr.mxu0 0.0
    %670 = vmatpush1.msra.mxu0 0.0
    %671 = vmatprep.subr.mxu0 0.0
    %672 = vmatpush1.msra.mxu0 0.0
    %673 = vmatprep.subr.mxu0 0.0
    %674 = vmatpush1.msra.mxu0 0.0
    %675 = vmatprep.subr.mxu0 0.0
    %676 = vmatpush1.msra.mxu0 0.0
    %677 = vmatprep.subr.mxu0 0.0
    %678 = vmatpush1.msra.mxu0 0.0
    %679 = vmatprep.mubr.f32.mxu0 0.0
    %680 = vmatmul.mubr.f32.gmra.mrb[0].mxu0 %v610
    %v681 = vpop.f32.mrb[0].mxu0
    %v682 = vadd.f32 0.0, %v681
    %v683 = vpop.f32.mrb[0].mxu0
    %v684 = vadd.f32 0.0, %v683
    %685 = vdwg.mxu0
    %686 = vmatprep.subr.mxu0 %v380
    %687 = vmatpush1.msra.mxu0 %v379
    %688 = vmatprep.subr.mxu0 %v384
    %689 = vmatpush1.msra.mxu0 %v383
    %690 = vmatprep.subr.mxu0 %v388
    %691 = vmatpush1.msra.mxu0 %v387
    %692 = vmatprep.subr.mxu0 %v392
    %693 = vmatpush1.msra.mxu0 %v391
    %694 = vmatprep.subr.mxu0 %v396
    %695 = vmatpush1.msra.mxu0 %v395
    %696 = vmatprep.subr.mxu0 %v400
    %697 = vmatpush1.msra.mxu0 %v399
    %698 = vmatprep.subr.mxu0 %v404
    %699 = vmatpush1.msra.mxu0 %v403
    %700 = vmatprep.subr.mxu0 %v408
    %701 = vmatpush1.msra.mxu0 %v407
    %702 = vmatprep.subr.mxu0 %v412
    %703 = vmatpush1.msra.mxu0 %v411
    %704 = vmatprep.subr.mxu0 %v416
    %705 = vmatpush1.msra.mxu0 %v415
    %706 = vmatprep.subr.mxu0 %v420
    %707 = vmatpush1.msra.mxu0 %v419
    %708 = vmatprep.subr.mxu0 %v424
    %709 = vmatpush1.msra.mxu0 %v423
    %710 = vmatprep.subr.mxu0 %v428
    %711 = vmatpush1.msra.mxu0 %v427
    %712 = vmatprep.subr.mxu0 %v432
    %713 = vmatpush1.msra.mxu0 %v431
    %714 = vmatprep.subr.mxu0 %v436
    %715 = vmatpush1.msra.mxu0 %v435
    %716 = vmatprep.subr.mxu0 %v440
    %717 = vmatpush1.msra.mxu0 %v439
    %718 = vmatprep.subr.mxu0 0.0
    %719 = vmatpush1.msra.mxu0 0.0
    %720 = vmatprep.subr.mxu0 0.0
    %721 = vmatpush1.msra.mxu0 0.0
    %722 = vmatprep.subr.mxu0 0.0
    %723 = vmatpush1.msra.mxu0 0.0
    %724 = vmatprep.subr.mxu0 0.0
    %725 = vmatpush1.msra.mxu0 0.0
    %726 = vmatprep.subr.mxu0 0.0
    %727 = vmatpush1.msra.mxu0 0.0
    %728 = vmatprep.subr.mxu0 0.0
    %729 = vmatpush1.msra.mxu0 0.0
    %730 = vmatprep.subr.mxu0 0.0
    %731 = vmatpush1.msra.mxu0 0.0
    %732 = vmatprep.subr.mxu0 0.0
    %733 = vmatpush1.msra.mxu0 0.0
    %734 = vmatprep.subr.mxu0 0.0
    %735 = vmatpush1.msra.mxu0 0.0
    %736 = vmatprep.subr.mxu0 0.0
    %737 = vmatpush1.msra.mxu0 0.0
    %738 = vmatprep.subr.mxu0 0.0
    %739 = vmatpush1.msra.mxu0 0.0
    %740 = vmatprep.subr.mxu0 0.0
    %741 = vmatpush1.msra.mxu0 0.0
    %742 = vmatprep.subr.mxu0 0.0
    %743 = vmatpush1.msra.mxu0 0.0
    %744 = vmatprep.subr.mxu0 0.0
    %745 = vmatpush1.msra.mxu0 0.0
    %746 = vmatprep.subr.mxu0 0.0
    %747 = vmatpush1.msra.mxu0 0.0
    %748 = vmatprep.subr.mxu0 0.0
    %749 = vmatpush1.msra.mxu0 0.0
    %750 = vmatprep.mubr.f32.mxu0 0.0
    %751 = vmatmul.mubr.f32.gmra.mrb[0].mxu0 %v610
    %v752 = vpop.f32.mrb[0].mxu0
    %v753 = vadd.f32 0.0, %v752
    %v754 = vpop.f32.mrb[0].mxu0
    %v755 = vadd.f32 0.0, %v754
    %756 = vdwg.mxu0
    %v757 = vadd.f32 %v611, %v682
    %v758 = vadd.f32 %v612, %v684
    %v759 = vadd.f32 %v613, %v753
    %v760 = vadd.f32 %v614, %v755
    %v761 = vxor.u32 %v757, 2147483648
    %v762 = vxor.u32 %v758, 2147483648
    %v763 = vxor.u32 %v759, 2147483648
    %v764 = vmul.f32 %v761, 1.442695
    %v765 = vpow.pop %v764
    %v766 = vmul.f32 %v762, 1.442695
    %v767 = vpow.pop %v766
    %v768 = vmul.f32 %v763, 1.442695
    %v769 = vpow.pop %v768
    %v770 = vadd.f32 %v765, 1.0
    %v771 = vadd.f32 %v767, 1.0
    %v772 = vadd.f32 %v769, 1.0
    %v773 = vrcp.pop %v770
    %v774 = vmul.f32 1.0, %v773
    %v775 = vrcp.pop %v771
    %v776 = vmul.f32 1.0, %v775
    %v777 = vrcp.pop %v772
    %v778 = vmul.f32 1.0, %v777
    %v779 = vtanh.pop %v760
    %v780 = vmul.f32 %v776, %v608
    %v781 = vmul.f32 %v774, %v779
    %v782 = vadd.f32 %v780, %v781
    %v783 = vtanh.pop %v782
    %v784 = vmul.f32 %v778, %v783
    %v785 = vld [vmem:[#allocation2 + $0x40] sm:$0xff]
    %v786 = vld [vmem:[#allocation2 + $0x48] sm:$0xff]
    %v787 = vld [vmem:[#allocation2 + $0x50] sm:$0xff]
    %v788 = vld [vmem:[#allocation2 + $0x58] sm:$0xff]
    %789 = vmatprep.subr.mxu0 %v378
    %790 = vmatpush1.msra.mxu0 %v377
    %791 = vmatprep.subr.mxu0 %v382
    %792 = vmatpush1.msra.mxu0 %v381
    %793 = vmatprep.subr.mxu0 %v386
    %794 = vmatpush1.msra.mxu0 %v385
    %795 = vmatprep.subr.mxu0 %v390
    %796 = vmatpush1.msra.mxu0 %v389
    %797 = vmatprep.subr.mxu0 %v394
    %798 = vmatpush1.msra.mxu0 %v393
    %799 = vmatprep.subr.mxu0 %v398
    %800 = vmatpush1.msra.mxu0 %v397
    %801 = vmatprep.subr.mxu0 %v402
    %802 = vmatpush1.msra.mxu0 %v401
    %803 = vmatprep.subr.mxu0 %v406
    %804 = vmatpush1.msra.mxu0 %v405
    %805 = vmatprep.subr.mxu0 %v410
    %806 = vmatpush1.msra.mxu0 %v409
    %807 = vmatprep.subr.mxu0 %v414
    %808 = vmatpush1.msra.mxu0 %v413
    %809 = vmatprep.subr.mxu0 %v418
    %810 = vmatpush1.msra.mxu0 %v417
    %811 = vmatprep.subr.mxu0 %v422
    %812 = vmatpush1.msra.mxu0 %v421
    %813 = vmatprep.subr.mxu0 %v426
    %814 = vmatpush1.msra.mxu0 %v425
    %815 = vmatprep.subr.mxu0 %v430
    %816 = vmatpush1.msra.mxu0 %v429
    %817 = vmatprep.subr.mxu0 %v434
    %818 = vmatpush1.msra.mxu0 %v433
    %819 = vmatprep.subr.mxu0 %v438
    %820 = vmatpush1.msra.mxu0 %v437
    %821 = vmatprep.subr.mxu0 0.0
    %822 = vmatpush1.msra.mxu0 0.0
    %823 = vmatprep.subr.mxu0 0.0
    %824 = vmatpush1.msra.mxu0 0.0
    %825 = vmatprep.subr.mxu0 0.0
    %826 = vmatpush1.msra.mxu0 0.0
    %827 = vmatprep.subr.mxu0 0.0
    %828 = vmatpush1.msra.mxu0 0.0
    %829 = vmatprep.subr.mxu0 0.0
    %830 = vmatpush1.msra.mxu0 0.0
    %831 = vmatprep.subr.mxu0 0.0
    %832 = vmatpush1.msra.mxu0 0.0
    %833 = vmatprep.subr.mxu0 0.0
    %834 = vmatpush1.msra.mxu0 0.0
    %835 = vmatprep.subr.mxu0 0.0
    %836 = vmatpush1.msra.mxu0 0.0
    %837 = vmatprep.subr.mxu0 0.0
    %838 = vmatpush1.msra.mxu0 0.0
    %839 = vmatprep.subr.mxu0 0.0
    %840 = vmatpush1.msra.mxu0 0.0
    %841 = vmatprep.subr.mxu0 0.0
    %842 = vmatpush1.msra.mxu0 0.0
    %843 = vmatprep.subr.mxu0 0.0
    %844 = vmatpush1.msra.mxu0 0.0
    %845 = vmatprep.subr.mxu0 0.0
    %846 = vmatpush1.msra.mxu0 0.0
    %847 = vmatprep.subr.mxu0 0.0
    %848 = vmatpush1.msra.mxu0 0.0
    %849 = vmatprep.subr.mxu0 0.0
    %850 = vmatpush1.msra.mxu0 0.0
    %851 = vmatprep.subr.mxu0 0.0
    %852 = vmatpush1.msra.mxu0 0.0
    %853 = vmatprep.mubr.f32.mxu0 0.0
    %854 = vmatmul.mubr.f32.gmra.mrb[0].mxu0 %v784
    %v855 = vpop.f32.mrb[0].mxu0
    %v856 = vadd.f32 0.0, %v855
    %v857 = vpop.f32.mrb[0].mxu0
    %v858 = vadd.f32 0.0, %v857
    %859 = vdwg.mxu0
    %860 = vmatprep.subr.mxu0 %v380
    %861 = vmatpush1.msra.mxu0 %v379
    %862 = vmatprep.subr.mxu0 %v384
    %863 = vmatpush1.msra.mxu0 %v383
    %864 = vmatprep.subr.mxu0 %v388
    %865 = vmatpush1.msra.mxu0 %v387
    %866 = vmatprep.subr.mxu0 %v392
    %867 = vmatpush1.msra.mxu0 %v391
    %868 = vmatprep.subr.mxu0 %v396
    %869 = vmatpush1.msra.mxu0 %v395
    %870 = vmatprep.subr.mxu0 %v400
    %871 = vmatpush1.msra.mxu0 %v399
    %872 = vmatprep.subr.mxu0 %v404
    %873 = vmatpush1.msra.mxu0 %v403
    %874 = vmatprep.subr.mxu0 %v408
    %875 = vmatpush1.msra.mxu0 %v407
    %876 = vmatprep.subr.mxu0 %v412
    %877 = vmatpush1.msra.mxu0 %v411
    %878 = vmatprep.subr.mxu0 %v416
    %879 = vmatpush1.msra.mxu0 %v415
    %880 = vmatprep.subr.mxu0 %v420
    %881 = vmatpush1.msra.mxu0 %v419
    %882 = vmatprep.subr.mxu0 %v424
    %883 = vmatpush1.msra.mxu0 %v423
    %884 = vmatprep.subr.mxu0 %v428
    %885 = vmatpush1.msra.mxu0 %v427
    %886 = vmatprep.subr.mxu0 %v432
    %887 = vmatpush1.msra.mxu0 %v431
    %888 = vmatprep.subr.mxu0 %v436
    %889 = vmatpush1.msra.mxu0 %v435
    %890 = vmatprep.subr.mxu0 %v440
    %891 = vmatpush1.msra.mxu0 %v439
    %892 = vmatprep.subr.mxu0 0.0
    %893 = vmatpush1.msra.mxu0 0.0
    %894 = vmatprep.subr.mxu0 0.0
    %895 = vmatpush1.msra.mxu0 0.0
    %896 = vmatprep.subr.mxu0 0.0
    %897 = vmatpush1.msra.mxu0 0.0
    %898 = vmatprep.subr.mxu0 0.0
    %899 = vmatpush1.msra.mxu0 0.0
    %900 = vmatprep.subr.mxu0 0.0
    %901 = vmatpush1.msra.mxu0 0.0
    %902 = vmatprep.subr.mxu0 0.0
    %903 = vmatpush1.msra.mxu0 0.0
    %904 = vmatprep.subr.mxu0 0.0
    %905 = vmatpush1.msra.mxu0 0.0
    %906 = vmatprep.subr.mxu0 0.0
    %907 = vmatpush1.msra.mxu0 0.0
    %908 = vmatprep.subr.mxu0 0.0
    %909 = vmatpush1.msra.mxu0 0.0
    %910 = vmatprep.subr.mxu0 0.0
    %911 = vmatpush1.msra.mxu0 0.0
    %912 = vmatprep.subr.mxu0 0.0
    %913 = vmatpush1.msra.mxu0 0.0
    %914 = vmatprep.subr.mxu0 0.0
    %915 = vmatpush1.msra.mxu0 0.0
    %916 = vmatprep.subr.mxu0 0.0
    %917 = vmatpush1.msra.mxu0 0.0
    %918 = vmatprep.subr.mxu0 0.0
    %919 = vmatpush1.msra.mxu0 0.0
    %920 = vmatprep.subr.mxu0 0.0
    %921 = vmatpush1.msra.mxu0 0.0
    %922 = vmatprep.subr.mxu0 0.0
    %923 = vmatpush1.msra.mxu0 0.0
    %924 = vmatprep.mubr.f32.mxu0 0.0
    %925 = vmatmul.mubr.f32.gmra.mrb[0].mxu0 %v784
    %v926 = vpop.f32.mrb[0].mxu0
    %v927 = vadd.f32 0.0, %v926
    %v928 = vpop.f32.mrb[0].mxu0
    %v929 = vadd.f32 0.0, %v928
    %930 = vdwg.mxu0
    %v931 = vadd.f32 %v785, %v856
    %v932 = vadd.f32 %v786, %v858
    %v933 = vadd.f32 %v787, %v927
    %v934 = vadd.f32 %v788, %v929
    %v935 = vxor.u32 %v931, 2147483648
    %v936 = vxor.u32 %v932, 2147483648
    %v937 = vxor.u32 %v933, 2147483648
    %v938 = vmul.f32 %v935, 1.442695
    %v939 = vpow.pop %v938
    %v940 = vmul.f32 %v936, 1.442695
    %v941 = vpow.pop %v940
    %v942 = vmul.f32 %v937, 1.442695
    %v943 = vpow.pop %v942
    %v944 = vadd.f32 %v939, 1.0
    %v945 = vadd.f32 %v941, 1.0
    %v946 = vadd.f32 %v943, 1.0
    %v947 = vrcp.pop %v944
    %v948 = vmul.f32 1.0, %v947
    %v949 = vrcp.pop %v945
    %v950 = vmul.f32 1.0, %v949
    %v951 = vrcp.pop %v946
    %v952 = vmul.f32 1.0, %v951
    %v953 = vtanh.pop %v934
    %v954 = vmul.f32 %v950, %v782
    %v955 = vmul.f32 %v948, %v953
    %v956 = vadd.f32 %v954, %v955
    %v957 = vtanh.pop %v956
    %v958 = vmul.f32 %v952, %v957
    %v959 = vld [vmem:[#allocation2 + $0x60] sm:$0xff]
    %v960 = vld [vmem:[#allocation2 + $0x68] sm:$0xff]
    %v961 = vld [vmem:[#allocation2 + $0x70] sm:$0xff]
    %v962 = vld [vmem:[#allocation2 + $0x78] sm:$0xff]
    %963 = vmatprep.subr.mxu0 %v378
    %964 = vmatpush1.msra.mxu0 %v377
    %965 = vmatprep.subr.mxu0 %v382
    %966 = vmatpush1.msra.mxu0 %v381
    %967 = vmatprep.subr.mxu0 %v386
    %968 = vmatpush1.msra.mxu0 %v385
    %969 = vmatprep.subr.mxu0 %v390
    %970 = vmatpush1.msra.mxu0 %v389
    %971 = vmatprep.subr.mxu0 %v394
    %972 = vmatpush1.msra.mxu0 %v393
    %973 = vmatprep.subr.mxu0 %v398
    %974 = vmatpush1.msra.mxu0 %v397
    %975 = vmatprep.subr.mxu0 %v402
    %976 = vmatpush1.msra.mxu0 %v401
    %977 = vmatprep.subr.mxu0 %v406
    %978 = vmatpush1.msra.mxu0 %v405
    %979 = vmatprep.subr.mxu0 %v410
    %980 = vmatpush1.msra.mxu0 %v409
    %981 = vmatprep.subr.mxu0 %v414
    %982 = vmatpush1.msra.mxu0 %v413
    %983 = vmatprep.subr.mxu0 %v418
    %984 = vmatpush1.msra.mxu0 %v417
    %985 = vmatprep.subr.mxu0 %v422
    %986 = vmatpush1.msra.mxu0 %v421
    %987 = vmatprep.subr.mxu0 %v426
    %988 = vmatpush1.msra.mxu0 %v425
    %989 = vmatprep.subr.mxu0 %v430
    %990 = vmatpush1.msra.mxu0 %v429
    %991 = vmatprep.subr.mxu0 %v434
    %992 = vmatpush1.msra.mxu0 %v433
    %993 = vmatprep.subr.mxu0 %v438
    %994 = vmatpush1.msra.mxu0 %v437
    %995 = vmatprep.subr.mxu0 0.0
    %996 = vmatpush1.msra.mxu0 0.0
    %997 = vmatprep.subr.mxu0 0.0
    %998 = vmatpush1.msra.mxu0 0.0
    %999 = vmatprep.subr.mxu0 0.0
    %1000 = vmatpush1.msra.mxu0 0.0
    %1001 = vmatprep.subr.mxu0 0.0
    %1002 = vmatpush1.msra.mxu0 0.0
    %1003 = vmatprep.subr.mxu0 0.0
    %1004 = vmatpush1.msra.mxu0 0.0
    %1005 = vmatprep.subr.mxu0 0.0
    %1006 = vmatpush1.msra.mxu0 0.0
    %1007 = vmatprep.subr.mxu0 0.0
    %1008 = vmatpush1.msra.mxu0 0.0
    %1009 = vmatprep.subr.mxu0 0.0
    %1010 = vmatpush1.msra.mxu0 0.0
    %1011 = vmatprep.subr.mxu0 0.0
    %1012 = vmatpush1.msra.mxu0 0.0
    %1013 = vmatprep.subr.mxu0 0.0
    %1014 = vmatpush1.msra.mxu0 0.0
    %1015 = vmatprep.subr.mxu0 0.0
    %1016 = vmatpush1.msra.mxu0 0.0
    %1017 = vmatprep.subr.mxu0 0.0
    %1018 = vmatpush1.msra.mxu0 0.0
    %1019 = vmatprep.subr.mxu0 0.0
    %1020 = vmatpush1.msra.mxu0 0.0
    %1021 = vmatprep.subr.mxu0 0.0
    %1022 = vmatpush1.msra.mxu0 0.0
    %1023 = vmatprep.subr.mxu0 0.0
    %1024 = vmatpush1.msra.mxu0 0.0
    %1025 = vmatprep.subr.mxu0 0.0
    %1026 = vmatpush1.msra.mxu0 0.0
    %1027 = vmatprep.mubr.f32.mxu0 0.0
    %1028 = vmatmul.mubr.f32.gmra.mrb[0].mxu0 %v958
    %v1029 = vpop.f32.mrb[0].mxu0
    %v1030 = vadd.f32 0.0, %v1029
    %v1031 = vpop.f32.mrb[0].mxu0
    %v1032 = vadd.f32 0.0, %v1031
    %1033 = vdwg.mxu0
    %1034 = vmatprep.subr.mxu0 %v380
    %1035 = vmatpush1.msra.mxu0 %v379
    %1036 = vmatprep.subr.mxu0 %v384
    %1037 = vmatpush1.msra.mxu0 %v383
    %1038 = vmatprep.subr.mxu0 %v388
    %1039 = vmatpush1.msra.mxu0 %v387
    %1040 = vmatprep.subr.mxu0 %v392
    %1041 = vmatpush1.msra.mxu0 %v391
    %1042 = vmatprep.subr.mxu0 %v396
    %1043 = vmatpush1.msra.mxu0 %v395
    %1044 = vmatprep.subr.mxu0 %v400
    %1045 = vmatpush1.msra.mxu0 %v399
    %1046 = vmatprep.subr.mxu0 %v404
    %1047 = vmatpush1.msra.mxu0 %v403
    %1048 = vmatprep.subr.mxu0 %v408
    %1049 = vmatpush1.msra.mxu0 %v407
    %1050 = vmatprep.subr.mxu0 %v412
    %1051 = vmatpush1.msra.mxu0 %v411
    %1052 = vmatprep.subr.mxu0 %v416
    %1053 = vmatpush1.msra.mxu0 %v415
    %1054 = vmatprep.subr.mxu0 %v420
    %1055 = vmatpush1.msra.mxu0 %v419
    %1056 = vmatprep.subr.mxu0 %v424
    %1057 = vmatpush1.msra.mxu0 %v423
    %1058 = vmatprep.subr.mxu0 %v428
    %1059 = vmatpush1.msra.mxu0 %v427
    %1060 = vmatprep.subr.mxu0 %v432
    %1061 = vmatpush1.msra.mxu0 %v431
    %1062 = vmatprep.subr.mxu0 %v436
    %1063 = vmatpush1.msra.mxu0 %v435
    %1064 = vmatprep.subr.mxu0 %v440
    %1065 = vmatpush1.msra.mxu0 %v439
    %1066 = vmatprep.subr.mxu0 0.0
    %1067 = vmatpush1.msra.mxu0 0.0
    %1068 = vmatprep.subr.mxu0 0.0
    %1069 = vmatpush1.msra.mxu0 0.0
    %1070 = vmatprep.subr.mxu0 0.0
    %1071 = vmatpush1.msra.mxu0 0.0
    %1072 = vmatprep.subr.mxu0 0.0
    %1073 = vmatpush1.msra.mxu0 0.0
    %1074 = vmatprep.subr.mxu0 0.0
    %1075 = vmatpush1.msra.mxu0 0.0
    %1076 = vmatprep.subr.mxu0 0.0
    %1077 = vmatpush1.msra.mxu0 0.0
    %1078 = vmatprep.subr.mxu0 0.0
    %1079 = vmatpush1.msra.mxu0 0.0
    %1080 = vmatprep.subr.mxu0 0.0
    %1081 = vmatpush1.msra.mxu0 0.0
    %1082 = vmatprep.subr.mxu0 0.0
    %1083 = vmatpush1.msra.mxu0 0.0
    %1084 = vmatprep.subr.mxu0 0.0
    %1085 = vmatpush1.msra.mxu0 0.0
    %1086 = vmatprep.subr.mxu0 0.0
    %1087 = vmatpush1.msra.mxu0 0.0
    %1088 = vmatprep.subr.mxu0 0.0
    %1089 = vmatpush1.msra.mxu0 0.0
    %1090 = vmatprep.subr.mxu0 0.0
    %1091 = vmatpush1.msra.mxu0 0.0
    %1092 = vmatprep.subr.mxu0 0.0
    %1093 = vmatpush1.msra.mxu0 0.0
    %1094 = vmatprep.subr.mxu0 0.0
    %1095 = vmatpush1.msra.mxu0 0.0
    %1096 = vmatprep.subr.mxu0 0.0
    %1097 = vmatpush1.msra.mxu0 0.0
    %1098 = vmatprep.mubr.f32.mxu0 0.0
    %1099 = vmatmul.mubr.f32.gmra.mrb[0].mxu0 %v958
    %v1100 = vpop.f32.mrb[0].mxu0
    %v1101 = vadd.f32 0.0, %v1100
    %v1102 = vpop.f32.mrb[0].mxu0
    %v1103 = vadd.f32 0.0, %v1102
    %1104 = vdwg.mxu0
    %v1105 = vadd.f32 %v959, %v1030
    %v1106 = vadd.f32 %v960, %v1032
    %v1107 = vadd.f32 %v961, %v1101
    %v1108 = vadd.f32 %v962, %v1103
    %v1109 = vxor.u32 %v1105, 2147483648
    %v1110 = vxor.u32 %v1106, 2147483648
    %v1111 = vxor.u32 %v1107, 2147483648
    %v1112 = vmul.f32 %v1109, 1.442695
    %v1113 = vpow.pop %v1112
    %v1114 = vmul.f32 %v1110, 1.442695
    %v1115 = vpow.pop %v1114
    %v1116 = vmul.f32 %v1111, 1.442695
    %v1117 = vpow.pop %v1116
    %v1118 = vadd.f32 %v1113, 1.0
    %v1119 = vadd.f32 %v1115, 1.0
    %v1120 = vadd.f32 %v1117, 1.0
    %v1121 = vrcp.pop %v1118
    %v1122 = vmul.f32 1.0, %v1121
    %v1123 = vrcp.pop %v1119
    %v1124 = vmul.f32 1.0, %v1123
    %v1125 = vrcp.pop %v1120
    %v1126 = vmul.f32 1.0, %v1125
    %v1127 = vtanh.pop %v1108
    %v1128 = vmul.f32 %v1124, %v956
    %v1129 = vmul.f32 %v1122, %v1127
    %v1130 = vadd.f32 %v1128, %v1129
    %v1131 = vtanh.pop %v1130
    %v1132 = vmul.f32 %v1126, %v1131
    %v1133 = vld [vmem:[#allocation2 + $0x80] sm:$0xff]
    %v1134 = vld [vmem:[#allocation2 + $0x88] sm:$0xff]
    %v1135 = vld [vmem:[#allocation2 + $0x90] sm:$0xff]
    %v1136 = vld [vmem:[#allocation2 + $0x98] sm:$0xff]
    %1137 = vmatprep.subr.mxu0 %v378
    %1138 = vmatpush1.msra.mxu0 %v377
    %1139 = vmatprep.subr.mxu0 %v382
    %1140 = vmatpush1.msra.mxu0 %v381
    %1141 = vmatprep.subr.mxu0 %v386
    %1142 = vmatpush1.msra.mxu0 %v385
    %1143 = vmatprep.subr.mxu0 %v390
    %1144 = vmatpush1.msra.mxu0 %v389
    %1145 = vmatprep.subr.mxu0 %v394
    %1146 = vmatpush1.msra.mxu0 %v393
    %1147 = vmatprep.subr.mxu0 %v398
    %1148 = vmatpush1.msra.mxu0 %v397
    %1149 = vmatprep.subr.mxu0 %v402
    %1150 = vmatpush1.msra.mxu0 %v401
    %1151 = vmatprep.subr.mxu0 %v406
    %1152 = vmatpush1.msra.mxu0 %v405
    %1153 = vmatprep.subr.mxu0 %v410
    %1154 = vmatpush1.msra.mxu0 %v409
    %1155 = vmatprep.subr.mxu0 %v414
    %1156 = vmatpush1.msra.mxu0 %v413
    %1157 = vmatprep.subr.mxu0 %v418
    %1158 = vmatpush1.msra.mxu0 %v417
    %1159 = vmatprep.subr.mxu0 %v422
    %1160 = vmatpush1.msra.mxu0 %v421
    %1161 = vmatprep.subr.mxu0 %v426
    %1162 = vmatpush1.msra.mxu0 %v425
    %1163 = vmatprep.subr.mxu0 %v430
    %1164 = vmatpush1.msra.mxu0 %v429
    %1165 = vmatprep.subr.mxu0 %v434
    %1166 = vmatpush1.msra.mxu0 %v433
    %1167 = vmatprep.subr.mxu0 %v438
    %1168 = vmatpush1.msra.mxu0 %v437
    %1169 = vmatprep.subr.mxu0 0.0
    %1170 = vmatpush1.msra.mxu0 0.0
    %1171 = vmatprep.subr.mxu0 0.0
    %1172 = vmatpush1.msra.mxu0 0.0
    %1173 = vmatprep.subr.mxu0 0.0
    %1174 = vmatpush1.msra.mxu0 0.0
    %1175 = vmatprep.subr.mxu0 0.0
    %1176 = vmatpush1.msra.mxu0 0.0
    %1177 = vmatprep.subr.mxu0 0.0
    %1178 = vmatpush1.msra.mxu0 0.0
    %1179 = vmatprep.subr.mxu0 0.0
    %1180 = vmatpush1.msra.mxu0 0.0
    %1181 = vmatprep.subr.mxu0 0.0
    %1182 = vmatpush1.msra.mxu0 0.0
    %1183 = vmatprep.subr.mxu0 0.0
    %1184 = vmatpush1.msra.mxu0 0.0
    %1185 = vmatprep.subr.mxu0 0.0
    %1186 = vmatpush1.msra.mxu0 0.0
    %1187 = vmatprep.subr.mxu0 0.0
    %1188 = vmatpush1.msra.mxu0 0.0
    %1189 = vmatprep.subr.mxu0 0.0
    %1190 = vmatpush1.msra.mxu0 0.0
    %1191 = vmatprep.subr.mxu0 0.0
    %1192 = vmatpush1.msra.mxu0 0.0
    %1193 = vmatprep.subr.mxu0 0.0
    %1194 = vmatpush1.msra.mxu0 0.0
    %1195 = vmatprep.subr.mxu0 0.0
    %1196 = vmatpush1.msra.mxu0 0.0
    %1197 = vmatprep.subr.mxu0 0.0
    %1198 = vmatpush1.msra.mxu0 0.0
    %1199 = vmatprep.subr.mxu0 0.0
    %1200 = vmatpush1.msra.mxu0 0.0
    %1201 = vmatprep.mubr.f32.mxu0 0.0
    %1202 = vmatmul.mubr.f32.gmra.mrb[0].mxu0 %v1132
    %v1203 = vpop.f32.mrb[0].mxu0
    %v1204 = vadd.f32 0.0, %v1203
    %v1205 = vpop.f32.mrb[0].mxu0
    %v1206 = vadd.f32 0.0, %v1205
    %1207 = vdwg.mxu0
    %1208 = vmatprep.subr.mxu0 %v380
    %1209 = vmatpush1.msra.mxu0 %v379
    %1210 = vmatprep.subr.mxu0 %v384
    %1211 = vmatpush1.msra.mxu0 %v383
    %1212 = vmatprep.subr.mxu0 %v388
    %1213 = vmatpush1.msra.mxu0 %v387
    %1214 = vmatprep.subr.mxu0 %v392
    %1215 = vmatpush1.msra.mxu0 %v391
    %1216 = vmatprep.subr.mxu0 %v396
    %1217 = vmatpush1.msra.mxu0 %v395
    %1218 = vmatprep.subr.mxu0 %v400
    %1219 = vmatpush1.msra.mxu0 %v399
    %1220 = vmatprep.subr.mxu0 %v404
    %1221 = vmatpush1.msra.mxu0 %v403
    %1222 = vmatprep.subr.mxu0 %v408
    %1223 = vmatpush1.msra.mxu0 %v407
    %1224 = vmatprep.subr.mxu0 %v412
    %1225 = vmatpush1.msra.mxu0 %v411
    %1226 = vmatprep.subr.mxu0 %v416
    %1227 = vmatpush1.msra.mxu0 %v415
    %1228 = vmatprep.subr.mxu0 %v420
    %1229 = vmatpush1.msra.mxu0 %v419
    %1230 = vmatprep.subr.mxu0 %v424
    %1231 = vmatpush1.msra.mxu0 %v423
    %1232 = vmatprep.subr.mxu0 %v428
    %1233 = vmatpush1.msra.mxu0 %v427
    %1234 = vmatprep.subr.mxu0 %v432
    %1235 = vmatpush1.msra.mxu0 %v431
    %1236 = vmatprep.subr.mxu0 %v436
    %1237 = vmatpush1.msra.mxu0 %v435
    %1238 = vmatprep.subr.mxu0 %v440
    %1239 = vmatpush1.msra.mxu0 %v439
    %1240 = vmatprep.subr.mxu0 0.0
    %1241 = vmatpush1.msra.mxu0 0.0
    %1242 = vmatprep.subr.mxu0 0.0
    %1243 = vmatpush1.msra.mxu0 0.0
    %1244 = vmatprep.subr.mxu0 0.0
    %1245 = vmatpush1.msra.mxu0 0.0
    %1246 = vmatprep.subr.mxu0 0.0
    %1247 = vmatpush1.msra.mxu0 0.0
    %1248 = vmatprep.subr.mxu0 0.0
    %1249 = vmatpush1.msra.mxu0 0.0
    %1250 = vmatprep.subr.mxu0 0.0
    %1251 = vmatpush1.msra.mxu0 0.0
    %1252 = vmatprep.subr.mxu0 0.0
    %1253 = vmatpush1.msra.mxu0 0.0
    %1254 = vmatprep.subr.mxu0 0.0
    %1255 = vmatpush1.msra.mxu0 0.0
    %1256 = vmatprep.subr.mxu0 0.0
    %1257 = vmatpush1.msra.mxu0 0.0
    %1258 = vmatprep.subr.mxu0 0.0
    %1259 = vmatpush1.msra.mxu0 0.0
    %1260 = vmatprep.subr.mxu0 0.0
    %1261 = vmatpush1.msra.mxu0 0.0
    %1262 = vmatprep.subr.mxu0 0.0
    %1263 = vmatpush1.msra.mxu0 0.0
    %1264 = vmatprep.subr.mxu0 0.0
    %1265 = vmatpush1.msra.mxu0 0.0
    %1266 = vmatprep.subr.mxu0 0.0
    %1267 = vmatpush1.msra.mxu0 0.0
    %1268 = vmatprep.subr.mxu0 0.0
    %1269 = vmatpush1.msra.mxu0 0.0
    %1270 = vmatprep.subr.mxu0 0.0
    %1271 = vmatpush1.msra.mxu0 0.0
    %1272 = vmatprep.mubr.f32.mxu0 0.0
    %1273 = vmatmul.mubr.f32.gmra.mrb[0].mxu0 %v1132
    %v1274 = vpop.f32.mrb[0].mxu0
    %v1275 = vadd.f32 0.0, %v1274
    %v1276 = vpop.f32.mrb[0].mxu0
    %v1277 = vadd.f32 0.0, %v1276
    %1278 = vdwg.mxu0
    %v1279 = vadd.f32 %v1133, %v1204
    %v1280 = vadd.f32 %v1134, %v1206
    %v1281 = vadd.f32 %v1135, %v1275
    %v1282 = vadd.f32 %v1136, %v1277
    %v1283 = vxor.u32 %v1279, 2147483648
    %v1284 = vxor.u32 %v1280, 2147483648
    %v1285 = vxor.u32 %v1281, 2147483648
    %v1286 = vmul.f32 %v1283, 1.442695
    %v1287 = vpow.pop %v1286
    %v1288 = vmul.f32 %v1284, 1.442695
    %v1289 = vpow.pop %v1288
    %v1290 = vmul.f32 %v1285, 1.442695
    %v1291 = vpow.pop %v1290
    %v1292 = vadd.f32 %v1287, 1.0
    %v1293 = vadd.f32 %v1289, 1.0
    %v1294 = vadd.f32 %v1291, 1.0
    %v1295 = vrcp.pop %v1292
    %v1296 = vmul.f32 1.0, %v1295
    %v1297 = vrcp.pop %v1293
    %v1298 = vmul.f32 1.0, %v1297
    %v1299 = vrcp.pop %v1294
    %v1300 = vmul.f32 1.0, %v1299
    %v1301 = vtanh.pop %v1282
    %v1302 = vmul.f32 %v1298, %v1130
    %v1303 = vmul.f32 %v1296, %v1301
    %v1304 = vadd.f32 %v1302, %v1303
    %v1305 = vtanh.pop %v1304
    %v1306 = vmul.f32 %v1300, %v1305
    %v1307 = vld [vmem:[#allocation2 + $0xa0] sm:$0xff]
    %v1308 = vld [vmem:[#allocation2 + $0xa8] sm:$0xff]
    %v1309 = vld [vmem:[#allocation2 + $0xb0] sm:$0xff]
    %v1310 = vld [vmem:[#allocation2 + $0xb8] sm:$0xff]
    %1311 = vmatprep.subr.mxu0 %v378
    %1312 = vmatpush1.msra.mxu0 %v377
    %1313 = vmatprep.subr.mxu0 %v382
    %1314 = vmatpush1.msra.mxu0 %v381
    %1315 = vmatprep.subr.mxu0 %v386
    %1316 = vmatpush1.msra.mxu0 %v385
    %1317 = vmatprep.subr.mxu0 %v390
    %1318 = vmatpush1.msra.mxu0 %v389
    %1319 = vmatprep.subr.mxu0 %v394
    %1320 = vmatpush1.msra.mxu0 %v393
    %1321 = vmatprep.subr.mxu0 %v398
    %1322 = vmatpush1.msra.mxu0 %v397
    %1323 = vmatprep.subr.mxu0 %v402
    %1324 = vmatpush1.msra.mxu0 %v401
    %1325 = vmatprep.subr.mxu0 %v406
    %1326 = vmatpush1.msra.mxu0 %v405
    %1327 = vmatprep.subr.mxu0 %v410
    %1328 = vmatpush1.msra.mxu0 %v409
    %1329 = vmatprep.subr.mxu0 %v414
    %1330 = vmatpush1.msra.mxu0 %v413
    %1331 = vmatprep.subr.mxu0 %v418
    %1332 = vmatpush1.msra.mxu0 %v417
    %1333 = vmatprep.subr.mxu0 %v422
    %1334 = vmatpush1.msra.mxu0 %v421
    %1335 = vmatprep.subr.mxu0 %v426
    %1336 = vmatpush1.msra.mxu0 %v425
    %1337 = vmatprep.subr.mxu0 %v430
    %1338 = vmatpush1.msra.mxu0 %v429
    %1339 = vmatprep.subr.mxu0 %v434
    %1340 = vmatpush1.msra.mxu0 %v433
    %1341 = vmatprep.subr.mxu0 %v438
    %1342 = vmatpush1.msra.mxu0 %v437
    %1343 = vmatprep.subr.mxu0 0.0
    %1344 = vmatpush1.msra.mxu0 0.0
    %1345 = vmatprep.subr.mxu0 0.0
    %1346 = vmatpush1.msra.mxu0 0.0
    %1347 = vmatprep.subr.mxu0 0.0
    %1348 = vmatpush1.msra.mxu0 0.0
    %1349 = vmatprep.subr.mxu0 0.0
    %1350 = vmatpush1.msra.mxu0 0.0
    %1351 = vmatprep.subr.mxu0 0.0
    %1352 = vmatpush1.msra.mxu0 0.0
    %1353 = vmatprep.subr.mxu0 0.0
    %1354 = vmatpush1.msra.mxu0 0.0
    %1355 = vmatprep.subr.mxu0 0.0
    %1356 = vmatpush1.msra.mxu0 0.0
    %1357 = vmatprep.subr.mxu0 0.0
    %1358 = vmatpush1.msra.mxu0 0.0
    %1359 = vmatprep.subr.mxu0 0.0
    %1360 = vmatpush1.msra.mxu0 0.0
    %1361 = vmatprep.subr.mxu0 0.0
    %1362 = vmatpush1.msra.mxu0 0.0
    %1363 = vmatprep.subr.mxu0 0.0
    %1364 = vmatpush1.msra.mxu0 0.0
    %1365 = vmatprep.subr.mxu0 0.0
    %1366 = vmatpush1.msra.mxu0 0.0
    %1367 = vmatprep.subr.mxu0 0.0
    %1368 = vmatpush1.msra.mxu0 0.0
    %1369 = vmatprep.subr.mxu0 0.0
    %1370 = vmatpush1.msra.mxu0 0.0
    %1371 = vmatprep.subr.mxu0 0.0
    %1372 = vmatpush1.msra.mxu0 0.0
    %1373 = vmatprep.subr.mxu0 0.0
    %1374 = vmatpush1.msra.mxu0 0.0
    %1375 = vmatprep.mubr.f32.mxu0 0.0
    %1376 = vmatmul.mubr.f32.gmra.mrb[0].mxu0 %v1306
    %v1377 = vpop.f32.mrb[0].mxu0
    %v1378 = vadd.f32 0.0, %v1377
    %v1379 = vpop.f32.mrb[0].mxu0
    %v1380 = vadd.f32 0.0, %v1379
    %1381 = vdwg.mxu0
    %1382 = vmatprep.subr.mxu0 %v380
    %1383 = vmatpush1.msra.mxu0 %v379
    %1384 = vmatprep.subr.mxu0 %v384
    %1385 = vmatpush1.msra.mxu0 %v383
    %1386 = vmatprep.subr.mxu0 %v388
    %1387 = vmatpush1.msra.mxu0 %v387
    %1388 = vmatprep.subr.mxu0 %v392
    %1389 = vmatpush1.msra.mxu0 %v391
    %1390 = vmatprep.subr.mxu0 %v396
    %1391 = vmatpush1.msra.mxu0 %v395
    %1392 = vmatprep.subr.mxu0 %v400
    %1393 = vmatpush1.msra.mxu0 %v399
    %1394 = vmatprep.subr.mxu0 %v404
    %1395 = vmatpush1.msra.mxu0 %v403
    %1396 = vmatprep.subr.mxu0 %v408
    %1397 = vmatpush1.msra.mxu0 %v407
    %1398 = vmatprep.subr.mxu0 %v412
    %1399 = vmatpush1.msra.mxu0 %v411
    %1400 = vmatprep.subr.mxu0 %v416
    %1401 = vmatpush1.msra.mxu0 %v415
    %1402 = vmatprep.subr.mxu0 %v420
    %1403 = vmatpush1.msra.mxu0 %v419
    %1404 = vmatprep.subr.mxu0 %v424
    %1405 = vmatpush1.msra.mxu0 %v423
    %1406 = vmatprep.subr.mxu0 %v428
    %1407 = vmatpush1.msra.mxu0 %v427
    %1408 = vmatprep.subr.mxu0 %v432
    %1409 = vmatpush1.msra.mxu0 %v431
    %1410 = vmatprep.subr.mxu0 %v436
    %1411 = vmatpush1.msra.mxu0 %v435
    %1412 = vmatprep.subr.mxu0 %v440
    %1413 = vmatpush1.msra.mxu0 %v439
    %1414 = vmatprep.subr.mxu0 0.0
    %1415 = vmatpush1.msra.mxu0 0.0
    %1416 = vmatprep.subr.mxu0 0.0
    %1417 = vmatpush1.msra.mxu0 0.0
    %1418 = vmatprep.subr.mxu0 0.0
    %1419 = vmatpush1.msra.mxu0 0.0
    %1420 = vmatprep.subr.mxu0 0.0
    %1421 = vmatpush1.msra.mxu0 0.0
    %1422 = vmatprep.subr.mxu0 0.0
    %1423 = vmatpush1.msra.mxu0 0.0
    %1424 = vmatprep.subr.mxu0 0.0
    %1425 = vmatpush1.msra.mxu0 0.0
    %1426 = vmatprep.subr.mxu0 0.0
    %1427 = vmatpush1.msra.mxu0 0.0
    %1428 = vmatprep.subr.mxu0 0.0
    %1429 = vmatpush1.msra.mxu0 0.0
    %1430 = vmatprep.subr.mxu0 0.0
    %1431 = vmatpush1.msra.mxu0 0.0
    %1432 = vmatprep.subr.mxu0 0.0
    %1433 = vmatpush1.msra.mxu0 0.0
    %1434 = vmatprep.subr.mxu0 0.0
    %1435 = vmatpush1.msra.mxu0 0.0
    %1436 = vmatprep.subr.mxu0 0.0
    %1437 = vmatpush1.msra.mxu0 0.0
    %1438 = vmatprep.subr.mxu0 0.0
    %1439 = vmatpush1.msra.mxu0 0.0
    %1440 = vmatprep.subr.mxu0 0.0
    %1441 = vmatpush1.msra.mxu0 0.0
    %1442 = vmatprep.subr.mxu0 0.0
    %1443 = vmatpush1.msra.mxu0 0.0
    %1444 = vmatprep.subr.mxu0 0.0
    %1445 = vmatpush1.msra.mxu0 0.0
    %1446 = vmatprep.mubr.f32.mxu0 0.0
    %1447 = vmatmul.mubr.f32.gmra.mrb[0].mxu0 %v1306
    %v1448 = vpop.f32.mrb[0].mxu0
    %v1449 = vadd.f32 0.0, %v1448
    %v1450 = vpop.f32.mrb[0].mxu0
    %v1451 = vadd.f32 0.0, %v1450
    %1452 = vdwg.mxu0
    %v1453 = vadd.f32 %v1307, %v1378
    %v1454 = vadd.f32 %v1308, %v1380
    %v1455 = vadd.f32 %v1309, %v1449
    %v1456 = vadd.f32 %v1310, %v1451
    %v1457 = vxor.u32 %v1453, 2147483648
    %v1458 = vxor.u32 %v1454, 2147483648
    %v1459 = vxor.u32 %v1455, 2147483648
    %v1460 = vmul.f32 %v1457, 1.442695
    %v1461 = vpow.pop %v1460
    %v1462 = vmul.f32 %v1458, 1.442695
    %v1463 = vpow.pop %v1462
    %v1464 = vmul.f32 %v1459, 1.442695
    %v1465 = vpow.pop %v1464
    %v1466 = vadd.f32 %v1461, 1.0
    %v1467 = vadd.f32 %v1463, 1.0
    %v1468 = vadd.f32 %v1465, 1.0
    %v1469 = vrcp.pop %v1466
    %v1470 = vmul.f32 1.0, %v1469
    %v1471 = vrcp.pop %v1467
    %v1472 = vmul.f32 1.0, %v1471
    %v1473 = vrcp.pop %v1468
    %v1474 = vmul.f32 1.0, %v1473
    %v1475 = vtanh.pop %v1456
    %v1476 = vmul.f32 %v1472, %v1304
    %v1477 = vmul.f32 %v1470, %v1475
    %v1478 = vadd.f32 %v1476, %v1477
    %v1479 = vtanh.pop %v1478
    %v1480 = vmul.f32 %v1474, %v1479
    %v1481 = vld [vmem:[#allocation2 + $0xc0] sm:$0xff]
    %v1482 = vld [vmem:[#allocation2 + $0xc8] sm:$0xff]
    %v1483 = vld [vmem:[#allocation2 + $0xd0] sm:$0xff]
    %v1484 = vld [vmem:[#allocation2 + $0xd8] sm:$0xff]
    %1485 = vmatprep.subr.mxu0 %v378
    %1486 = vmatpush1.msra.mxu0 %v377
    %1487 = vmatprep.subr.mxu0 %v382
    %1488 = vmatpush1.msra.mxu0 %v381
    %1489 = vmatprep.subr.mxu0 %v386
    %1490 = vmatpush1.msra.mxu0 %v385
    %1491 = vmatprep.subr.mxu0 %v390
    %1492 = vmatpush1.msra.mxu0 %v389
    %1493 = vmatprep.subr.mxu0 %v394
    %1494 = vmatpush1.msra.mxu0 %v393
    %1495 = vmatprep.subr.mxu0 %v398
    %1496 = vmatpush1.msra.mxu0 %v397
    %1497 = vmatprep.subr.mxu0 %v402
    %1498 = vmatpush1.msra.mxu0 %v401
    %1499 = vmatprep.subr.mxu0 %v406
    %1500 = vmatpush1.msra.mxu0 %v405
    %1501 = vmatprep.subr.mxu0 %v410
    %1502 = vmatpush1.msra.mxu0 %v409
    %1503 = vmatprep.subr.mxu0 %v414
    %1504 = vmatpush1.msra.mxu0 %v413
    %1505 = vmatprep.subr.mxu0 %v418
    %1506 = vmatpush1.msra.mxu0 %v417
    %1507 = vmatprep.subr.mxu0 %v422
    %1508 = vmatpush1.msra.mxu0 %v421
    %1509 = vmatprep.subr.mxu0 %v426
    %1510 = vmatpush1.msra.mxu0 %v425
    %1511 = vmatprep.subr.mxu0 %v430
    %1512 = vmatpush1.msra.mxu0 %v429
    %1513 = vmatprep.subr.mxu0 %v434
    %1514 = vmatpush1.msra.mxu0 %v433
    %1515 = vmatprep.subr.mxu0 %v438
    %1516 = vmatpush1.msra.mxu0 %v437
    %1517 = vmatprep.subr.mxu0 0.0
    %1518 = vmatpush1.msra.mxu0 0.0
    %1519 = vmatprep.subr.mxu0 0.0
    %1520 = vmatpush1.msra.mxu0 0.0
    %1521 = vmatprep.subr.mxu0 0.0
    %1522 = vmatpush1.msra.mxu0 0.0
    %1523 = vmatprep.subr.mxu0 0.0
    %1524 = vmatpush1.msra.mxu0 0.0
    %1525 = vmatprep.subr.mxu0 0.0
    %1526 = vmatpush1.msra.mxu0 0.0
    %1527 = vmatprep.subr.mxu0 0.0
    %1528 = vmatpush1.msra.mxu0 0.0
    %1529 = vmatprep.subr.mxu0 0.0
    %1530 = vmatpush1.msra.mxu0 0.0
    %1531 = vmatprep.subr.mxu0 0.0
    %1532 = vmatpush1.msra.mxu0 0.0
    %1533 = vmatprep.subr.mxu0 0.0
    %1534 = vmatpush1.msra.mxu0 0.0
    %1535 = vmatprep.subr.mxu0 0.0
    %1536 = vmatpush1.msra.mxu0 0.0
    %1537 = vmatprep.subr.mxu0 0.0
    %1538 = vmatpush1.msra.mxu0 0.0
    %1539 = vmatprep.subr.mxu0 0.0
    %1540 = vmatpush1.msra.mxu0 0.0
    %1541 = vmatprep.subr.mxu0 0.0
    %1542 = vmatpush1.msra.mxu0 0.0
    %1543 = vmatprep.subr.mxu0 0.0
    %1544 = vmatpush1.msra.mxu0 0.0
    %1545 = vmatprep.subr.mxu0 0.0
    %1546 = vmatpush1.msra.mxu0 0.0
    %1547 = vmatprep.subr.mxu0 0.0
    %1548 = vmatpush1.msra.mxu0 0.0
    %1549 = vmatprep.mubr.f32.mxu0 0.0
    %1550 = vmatmul.mubr.f32.gmra.mrb[0].mxu0 %v1480
    %v1551 = vpop.f32.mrb[0].mxu0
    %v1552 = vadd.f32 0.0, %v1551
    %v1553 = vpop.f32.mrb[0].mxu0
    %v1554 = vadd.f32 0.0, %v1553
    %1555 = vdwg.mxu0
    %1556 = vmatprep.subr.mxu0 %v380
    %1557 = vmatpush1.msra.mxu0 %v379
    %1558 = vmatprep.subr.mxu0 %v384
    %1559 = vmatpush1.msra.mxu0 %v383
    %1560 = vmatprep.subr.mxu0 %v388
    %1561 = vmatpush1.msra.mxu0 %v387
    %1562 = vmatprep.subr.mxu0 %v392
    %1563 = vmatpush1.msra.mxu0 %v391
    %1564 = vmatprep.subr.mxu0 %v396
    %1565 = vmatpush1.msra.mxu0 %v395
    %1566 = vmatprep.subr.mxu0 %v400
    %1567 = vmatpush1.msra.mxu0 %v399
    %1568 = vmatprep.subr.mxu0 %v404
    %1569 = vmatpush1.msra.mxu0 %v403
    %1570 = vmatprep.subr.mxu0 %v408
    %1571 = vmatpush1.msra.mxu0 %v407
    %1572 = vmatprep.subr.mxu0 %v412
    %1573 = vmatpush1.msra.mxu0 %v411
    %1574 = vmatprep.subr.mxu0 %v416
    %1575 = vmatpush1.msra.mxu0 %v415
    %1576 = vmatprep.subr.mxu0 %v420
    %1577 = vmatpush1.msra.mxu0 %v419
    %1578 = vmatprep.subr.mxu0 %v424
    %1579 = vmatpush1.msra.mxu0 %v423
    %1580 = vmatprep.subr.mxu0 %v428
    %1581 = vmatpush1.msra.mxu0 %v427
    %1582 = vmatprep.subr.mxu0 %v432
    %1583 = vmatpush1.msra.mxu0 %v431
    %1584 = vmatprep.subr.mxu0 %v436
    %1585 = vmatpush1.msra.mxu0 %v435
    %1586 = vmatprep.subr.mxu0 %v440
    %1587 = vmatpush1.msra.mxu0 %v439
    %1588 = vmatprep.subr.mxu0 0.0
    %1589 = vmatpush1.msra.mxu0 0.0
    %1590 = vmatprep.subr.mxu0 0.0
    %1591 = vmatpush1.msra.mxu0 0.0
    %1592 = vmatprep.subr.mxu0 0.0
    %1593 = vmatpush1.msra.mxu0 0.0
    %1594 = vmatprep.subr.mxu0 0.0
    %1595 = vmatpush1.msra.mxu0 0.0
    %1596 = vmatprep.subr.mxu0 0.0
    %1597 = vmatpush1.msra.mxu0 0.0
    %1598 = vmatprep.subr.mxu0 0.0
    %1599 = vmatpush1.msra.mxu0 0.0
    %1600 = vmatprep.subr.mxu0 0.0
    %1601 = vmatpush1.msra.mxu0 0.0
    %1602 = vmatprep.subr.mxu0 0.0
    %1603 = vmatpush1.msra.mxu0 0.0
    %1604 = vmatprep.subr.mxu0 0.0
    %1605 = vmatpush1.msra.mxu0 0.0
    %1606 = vmatprep.subr.mxu0 0.0
    %1607 = vmatpush1.msra.mxu0 0.0
    %1608 = vmatprep.subr.mxu0 0.0
    %1609 = vmatpush1.msra.mxu0 0.0
    %1610 = vmatprep.subr.mxu0 0.0
    %1611 = vmatpush1.msra.mxu0 0.0
    %1612 = vmatprep.subr.mxu0 0.0
    %1613 = vmatpush1.msra.mxu0 0.0
    %1614 = vmatprep.subr.mxu0 0.0
    %1615 = vmatpush1.msra.mxu0 0.0
    %1616 = vmatprep.subr.mxu0 0.0
    %1617 = vmatpush1.msra.mxu0 0.0
    %1618 = vmatprep.subr.mxu0 0.0
    %1619 = vmatpush1.msra.mxu0 0.0
    %1620 = vmatprep.mubr.f32.mxu0 0.0
    %1621 = vmatmul.mubr.f32.gmra.mrb[0].mxu0 %v1480
    %v1622 = vpop.f32.mrb[0].mxu0
    %v1623 = vadd.f32 0.0, %v1622
    %v1624 = vpop.f32.mrb[0].mxu0
    %v1625 = vadd.f32 0.0, %v1624
    %1626 = vdwg.mxu0
    %v1627 = vadd.f32 %v1481, %v1552
    %v1628 = vadd.f32 %v1482, %v1554
    %v1629 = vadd.f32 %v1483, %v1623
    %v1630 = vadd.f32 %v1484, %v1625
    %v1631 = vxor.u32 %v1627, 2147483648
    %v1632 = vxor.u32 %v1628, 2147483648
    %v1633 = vxor.u32 %v1629, 2147483648
    %v1634 = vmul.f32 %v1631, 1.442695
    %v1635 = vpow.pop %v1634
    %v1636 = vmul.f32 %v1632, 1.442695
    %v1637 = vpow.pop %v1636
    %v1638 = vmul.f32 %v1633, 1.442695
    %v1639 = vpow.pop %v1638
    %v1640 = vadd.f32 %v1635, 1.0
    %v1641 = vadd.f32 %v1637, 1.0
    %v1642 = vadd.f32 %v1639, 1.0
    %v1643 = vrcp.pop %v1640
    %v1644 = vmul.f32 1.0, %v1643
    %v1645 = vrcp.pop %v1641
    %v1646 = vmul.f32 1.0, %v1645
    %v1647 = vrcp.pop %v1642
    %v1648 = vmul.f32 1.0, %v1647
    %v1649 = vtanh.pop %v1630
    %v1650 = vmul.f32 %v1646, %v1478
    %v1651 = vmul.f32 %v1644, %v1649
    %v1652 = vadd.f32 %v1650, %v1651
    %v1653 = vtanh.pop %v1652
    %v1654 = vmul.f32 %v1648, %v1653
    %v1655 = vld [vmem:[#allocation2 + $0xe0] sm:$0xff]
    %v1656 = vld [vmem:[#allocation2 + $0xe8] sm:$0xff]
    %v1657 = vld [vmem:[#allocation2 + $0xf0] sm:$0xff]
    %v1658 = vld [vmem:[#allocation2 + $0xf8] sm:$0xff]
    %1659 = vmatprep.subr.mxu0 %v378
    %1660 = vmatpush1.msra.mxu0 %v377
    %1661 = vmatprep.subr.mxu0 %v382
    %1662 = vmatpush1.msra.mxu0 %v381
    %1663 = vmatprep.subr.mxu0 %v386
    %1664 = vmatpush1.msra.mxu0 %v385
    %1665 = vmatprep.subr.mxu0 %v390
    %1666 = vmatpush1.msra.mxu0 %v389
    %1667 = vmatprep.subr.mxu0 %v394
    %1668 = vmatpush1.msra.mxu0 %v393
    %1669 = vmatprep.subr.mxu0 %v398
    %1670 = vmatpush1.msra.mxu0 %v397
    %1671 = vmatprep.subr.mxu0 %v402
    %1672 = vmatpush1.msra.mxu0 %v401
    %1673 = vmatprep.subr.mxu0 %v406
    %1674 = vmatpush1.msra.mxu0 %v405
    %1675 = vmatprep.subr.mxu0 %v410
    %1676 = vmatpush1.msra.mxu0 %v409
    %1677 = vmatprep.subr.mxu0 %v414
    %1678 = vmatpush1.msra.mxu0 %v413
    %1679 = vmatprep.subr.mxu0 %v418
    %1680 = vmatpush1.msra.mxu0 %v417
    %1681 = vmatprep.subr.mxu0 %v422
    %1682 = vmatpush1.msra.mxu0 %v421
    %1683 = vmatprep.subr.mxu0 %v426
    %1684 = vmatpush1.msra.mxu0 %v425
    %1685 = vmatprep.subr.mxu0 %v430
    %1686 = vmatpush1.msra.mxu0 %v429
    %1687 = vmatprep.subr.mxu0 %v434
    %1688 = vmatpush1.msra.mxu0 %v433
    %1689 = vmatprep.subr.mxu0 %v438
    %1690 = vmatpush1.msra.mxu0 %v437
    %1691 = vmatprep.subr.mxu0 0.0
    %1692 = vmatpush1.msra.mxu0 0.0
    %1693 = vmatprep.subr.mxu0 0.0
    %1694 = vmatpush1.msra.mxu0 0.0
    %1695 = vmatprep.subr.mxu0 0.0
    %1696 = vmatpush1.msra.mxu0 0.0
    %1697 = vmatprep.subr.mxu0 0.0
    %1698 = vmatpush1.msra.mxu0 0.0
    %1699 = vmatprep.subr.mxu0 0.0
    %1700 = vmatpush1.msra.mxu0 0.0
    %1701 = vmatprep.subr.mxu0 0.0
    %1702 = vmatpush1.msra.mxu0 0.0
    %1703 = vmatprep.subr.mxu0 0.0
    %1704 = vmatpush1.msra.mxu0 0.0
    %1705 = vmatprep.subr.mxu0 0.0
    %1706 = vmatpush1.msra.mxu0 0.0
    %1707 = vmatprep.subr.mxu0 0.0
    %1708 = vmatpush1.msra.mxu0 0.0
    %1709 = vmatprep.subr.mxu0 0.0
    %1710 = vmatpush1.msra.mxu0 0.0
    %1711 = vmatprep.subr.mxu0 0.0
    %1712 = vmatpush1.msra.mxu0 0.0
    %1713 = vmatprep.subr.mxu0 0.0
    %1714 = vmatpush1.msra.mxu0 0.0
    %1715 = vmatprep.subr.mxu0 0.0
    %1716 = vmatpush1.msra.mxu0 0.0
    %1717 = vmatprep.subr.mxu0 0.0
    %1718 = vmatpush1.msra.mxu0 0.0
    %1719 = vmatprep.subr.mxu0 0.0
    %1720 = vmatpush1.msra.mxu0 0.0
    %1721 = vmatprep.subr.mxu0 0.0
    %1722 = vmatpush1.msra.mxu0 0.0
    %1723 = vmatprep.mubr.f32.mxu0 0.0
    %1724 = vmatmul.mubr.f32.gmra.mrb[0].mxu0 %v1654
    %v1725 = vpop.f32.mrb[0].mxu0
    %v1726 = vadd.f32 0.0, %v1725
    %v1727 = vpop.f32.mrb[0].mxu0
    %v1728 = vadd.f32 0.0, %v1727
    %1729 = vdwg.mxu0
    %1730 = vmatprep.subr.mxu0 %v380
    %1731 = vmatpush1.msra.mxu0 %v379
    %1732 = vmatprep.subr.mxu0 %v384
    %1733 = vmatpush1.msra.mxu0 %v383
    %1734 = vmatprep.subr.mxu0 %v388
    %1735 = vmatpush1.msra.mxu0 %v387
    %1736 = vmatprep.subr.mxu0 %v392
    %1737 = vmatpush1.msra.mxu0 %v391
    %1738 = vmatprep.subr.mxu0 %v396
    %1739 = vmatpush1.msra.mxu0 %v395
    %1740 = vmatprep.subr.mxu0 %v400
    %1741 = vmatpush1.msra.mxu0 %v399
    %1742 = vmatprep.subr.mxu0 %v404
    %1743 = vmatpush1.msra.mxu0 %v403
    %1744 = vmatprep.subr.mxu0 %v408
    %1745 = vmatpush1.msra.mxu0 %v407
    %1746 = vmatprep.subr.mxu0 %v412
    %1747 = vmatpush1.msra.mxu0 %v411
    %1748 = vmatprep.subr.mxu0 %v416
    %1749 = vmatpush1.msra.mxu0 %v415
    %1750 = vmatprep.subr.mxu0 %v420
    %1751 = vmatpush1.msra.mxu0 %v419
    %1752 = vmatprep.subr.mxu0 %v424
    %1753 = vmatpush1.msra.mxu0 %v423
    %1754 = vmatprep.subr.mxu0 %v428
    %1755 = vmatpush1.msra.mxu0 %v427
    %1756 = vmatprep.subr.mxu0 %v432
    %1757 = vmatpush1.msra.mxu0 %v431
    %1758 = vmatprep.subr.mxu0 %v436
    %1759 = vmatpush1.msra.mxu0 %v435
    %1760 = vmatprep.subr.mxu0 %v440
    %1761 = vmatpush1.msra.mxu0 %v439
    %1762 = vmatprep.subr.mxu0 0.0
    %1763 = vmatpush1.msra.mxu0 0.0
    %1764 = vmatprep.subr.mxu0 0.0
    %1765 = vmatpush1.msra.mxu0 0.0
    %1766 = vmatprep.subr.mxu0 0.0
    %1767 = vmatpush1.msra.mxu0 0.0
    %1768 = vmatprep.subr.mxu0 0.0
    %1769 = vmatpush1.msra.mxu0 0.0
    %1770 = vmatprep.subr.mxu0 0.0
    %1771 = vmatpush1.msra.mxu0 0.0
    %1772 = vmatprep.subr.mxu0 0.0
    %1773 = vmatpush1.msra.mxu0 0.0
    %1774 = vmatprep.subr.mxu0 0.0
    %1775 = vmatpush1.msra.mxu0 0.0
    %1776 = vmatprep.subr.mxu0 0.0
    %1777 = vmatpush1.msra.mxu0 0.0
    %1778 = vmatprep.subr.mxu0 0.0
    %1779 = vmatpush1.msra.mxu0 0.0
    %1780 = vmatprep.subr.mxu0 0.0
    %1781 = vmatpush1.msra.mxu0 0.0
    %1782 = vmatprep.subr.mxu0 0.0
    %1783 = vmatpush1.msra.mxu0 0.0
    %1784 = vmatprep.subr.mxu0 0.0
    %1785 = vmatpush1.msra.mxu0 0.0
    %1786 = vmatprep.subr.mxu0 0.0
    %1787 = vmatpush1.msra.mxu0 0.0
    %1788 = vmatprep.subr.mxu0 0.0
    %1789 = vmatpush1.msra.mxu0 0.0
    %1790 = vmatprep.subr.mxu0 0.0
    %1791 = vmatpush1.msra.mxu0 0.0
    %1792 = vmatprep.subr.mxu0 0.0
    %1793 = vmatpush1.msra.mxu0 0.0
    %1794 = vmatprep.mubr.f32.mxu0 0.0
    %1795 = vmatmul.mubr.f32.gmra.mrb[0].mxu0 %v1654
    %v1796 = vpop.f32.mrb[0].mxu0
    %v1797 = vadd.f32 0.0, %v1796
    %v1798 = vpop.f32.mrb[0].mxu0
    %v1799 = vadd.f32 0.0, %v1798
    %1800 = vdwg.mxu0
    %v1801 = vadd.f32 %v1655, %v1726
    %v1802 = vadd.f32 %v1656, %v1728
    %v1803 = vadd.f32 %v1657, %v1797
    %v1804 = vadd.f32 %v1658, %v1799
    %v1805 = vxor.u32 %v1801, 2147483648
    %v1806 = vxor.u32 %v1802, 2147483648
    %v1807 = vxor.u32 %v1803, 2147483648
    %v1808 = vmul.f32 %v1805, 1.442695
    %v1809 = vpow.pop %v1808
    %v1810 = vmul.f32 %v1806, 1.442695
    %v1811 = vpow.pop %v1810
    %v1812 = vmul.f32 %v1807, 1.442695
    %v1813 = vpow.pop %v1812
    %v1814 = vadd.f32 %v1809, 1.0
    %v1815 = vadd.f32 %v1811, 1.0
    %v1816 = vadd.f32 %v1813, 1.0
    %v1817 = vrcp.pop %v1814
    %v1818 = vmul.f32 1.0, %v1817
    %v1819 = vrcp.pop %v1815
    %v1820 = vmul.f32 1.0, %v1819
    %v1821 = vrcp.pop %v1816
    %v1822 = vmul.f32 1.0, %v1821
    %v1823 = vtanh.pop %v1804
    %v1824 = vmul.f32 %v1820, %v1652
    %v1825 = vmul.f32 %v1818, %v1823
    %v1826 = vadd.f32 %v1824, %v1825
    %v1827 = vtanh.pop %v1826
    %v1828 = vmul.f32 %v1822, %v1827
    %v1829 = vld [vmem:[#allocation6] sm:$0xff]
    %v1830 = vld [vmem:[#allocation6 + $0x8] sm:$0xff]
    %v1831 = vld [vmem:[#allocation6 + $0x10] sm:$0xff]
    %v1832 = vld [vmem:[#allocation6 + $0x18] sm:$0xff]
    %v1833 = vld [vmem:[#allocation6 + $0x20] sm:$0xff]
    %v1834 = vld [vmem:[#allocation6 + $0x28] sm:$0xff]
    %v1835 = vld [vmem:[#allocation6 + $0x30] sm:$0xff]
    %v1836 = vld [vmem:[#allocation6 + $0x38] sm:$0xff]
    %v1837 = vld [vmem:[#allocation6 + $0x40] sm:$0xff]
    %v1838 = vld [vmem:[#allocation6 + $0x48] sm:$0xff]
    %v1839 = vld [vmem:[#allocation6 + $0x50] sm:$0xff]
    %v1840 = vld [vmem:[#allocation6 + $0x58] sm:$0xff]
    %v1841 = vld [vmem:[#allocation6 + $0x60] sm:$0xff]
    %v1842 = vld [vmem:[#allocation6 + $0x68] sm:$0xff]
    %v1843 = vld [vmem:[#allocation6 + $0x70] sm:$0xff]
    %v1844 = vld [vmem:[#allocation6 + $0x78] sm:$0xff]
    %v1845 = vld [vmem:[%s5] sm:$0x1]
    %v1847 = vlaneseq
    %v1848 = vshrl.u32 %v1847, 7
    %v1849 = vsub.s32 0, %v1848
    %v1850 = vrot.slane %v1845, %v1849
    %1852 = vmatprep.subr.mxu0 0.0
    %1853 = vmatpush1.msra.mxu0 %v1829
    %1854 = vmatprep.subr.mxu0 0.0
    %1855 = vmatpush1.msra.mxu0 %v1830
    %1856 = vmatprep.subr.mxu0 0.0
    %1857 = vmatpush1.msra.mxu0 %v1831
    %1858 = vmatprep.subr.mxu0 0.0
    %1859 = vmatpush1.msra.mxu0 %v1832
    %1860 = vmatprep.subr.mxu0 0.0
    %1861 = vmatpush1.msra.mxu0 %v1833
    %1862 = vmatprep.subr.mxu0 0.0
    %1863 = vmatpush1.msra.mxu0 %v1834
    %1864 = vmatprep.subr.mxu0 0.0
    %1865 = vmatpush1.msra.mxu0 %v1835
    %1866 = vmatprep.subr.mxu0 0.0
    %1867 = vmatpush1.msra.mxu0 %v1836
    %1868 = vmatprep.subr.mxu0 0.0
    %1869 = vmatpush1.msra.mxu0 %v1837
    %1870 = vmatprep.subr.mxu0 0.0
    %1871 = vmatpush1.msra.mxu0 %v1838
    %1872 = vmatprep.subr.mxu0 0.0
    %1873 = vmatpush1.msra.mxu0 %v1839
    %1874 = vmatprep.subr.mxu0 0.0
    %1875 = vmatpush1.msra.mxu0 %v1840
    %1876 = vmatprep.subr.mxu0 0.0
    %1877 = vmatpush1.msra.mxu0 %v1841
    %1878 = vmatprep.subr.mxu0 0.0
    %1879 = vmatpush1.msra.mxu0 %v1842
    %1880 = vmatprep.subr.mxu0 0.0
    %1881 = vmatpush1.msra.mxu0 %v1843
    %1882 = vmatprep.subr.mxu0 0.0
    %1883 = vmatpush1.msra.mxu0 %v1844
    %1884 = vmatprep.subr.mxu0 0.0
    %1885 = vmatpush1.msra.mxu0 0.0
    %1886 = vmatprep.subr.mxu0 0.0
    %1887 = vmatpush1.msra.mxu0 0.0
    %1888 = vmatprep.subr.mxu0 0.0
    %1889 = vmatpush1.msra.mxu0 0.0
    %1890 = vmatprep.subr.mxu0 0.0
    %1891 = vmatpush1.msra.mxu0 0.0
    %1892 = vmatprep.subr.mxu0 0.0
    %1893 = vmatpush1.msra.mxu0 0.0
    %1894 = vmatprep.subr.mxu0 0.0
    %1895 = vmatpush1.msra.mxu0 0.0
    %1896 = vmatprep.subr.mxu0 0.0
    %1897 = vmatpush1.msra.mxu0 0.0
    %1898 = vmatprep.subr.mxu0 0.0
    %1899 = vmatpush1.msra.mxu0 0.0
    %1900 = vmatprep.subr.mxu0 0.0
    %1901 = vmatpush1.msra.mxu0 0.0
    %1902 = vmatprep.subr.mxu0 0.0
    %1903 = vmatpush1.msra.mxu0 0.0
    %1904 = vmatprep.subr.mxu0 0.0
    %1905 = vmatpush1.msra.mxu0 0.0
    %1906 = vmatprep.subr.mxu0 0.0
    %1907 = vmatpush1.msra.mxu0 0.0
    %1908 = vmatprep.subr.mxu0 0.0
    %1909 = vmatpush1.msra.mxu0 0.0
    %1910 = vmatprep.subr.mxu0 0.0
    %1911 = vmatpush1.msra.mxu0 0.0
    %1912 = vmatprep.subr.mxu0 0.0
    %1913 = vmatpush1.msra.mxu0 0.0
    %1914 = vmatprep.subr.mxu0 0.0
    %1915 = vmatpush1.msra.mxu0 0.0
    %1916 = vmatprep.mubr.f32.mxu0 0.0
    %1917 = vmatmul.mubr.f32.gmra.mrb[0].mxu0 %v1828
    %v1918 = vpop.f32.mrb[0].mxu0
    %v1919 = vadd.f32 %v1850, %v1918
    %v1920 = vpop.f32.mrb[0].mxu0
    %1921 = vdwg.mxu0
    %1922 = vst [vmem:[#allocation8] sm:$0xff] %v1919
    // Predicated region
    $region34: #{tpu_custom_call.1} parent=1 // pred_check
      _
    $region35: #{tpu_custom_call.1} parent=1 // pred_check_branch
      %1924 = sbr.rel (0) target = $region37
    $region36: #{tpu_custom_call.1} parent=1 // pred_region
      %s1926 = ssub.s32 128, 128
      %1927 = vsyncadd [#allocation5], %s1926
      %s1929 = sshll.u32 [#allocation8], 4
      %s1930 = int_to_ptr.vmem [resolvable:$true] %s1929
      %1932 = dma.vmem_to_hbm [thread:$0]  %s1930, 128, %s6, [#allocation5]
    $region37: #{tpu_custom_call.1} parent=1 // pred_fallthru
      _
    // Predicated region
    $region38: #{tpu_custom_call.1} parent=1 // pred_check
      _
    $region39: #{tpu_custom_call.1} parent=1 // pred_check_branch
      %1934 = sbr.rel (0) target = $region41
    $region40: #{tpu_custom_call.1} parent=1 // pred_region
      %1935 = dma.done [#allocation5], 128
    $region41: #{tpu_custom_call.1} parent=1 // pred_fallthru
      _
    %1936 = vsyncpa [#allocation4], 1
    %1937 = vsyncpa [#allocation7], 1
    %1938 = vsyncpa [#allocation5], 1

</llo_original>
